<compile_context>
chip_gen: v6e
topology: v6e:2x2x1
jax: 0.10.0
libtpu: 0.0.40
codegen_flags: <defaults>
</compile_context>

<pallas_src>
import functools

import jax
import jax.numpy as jnp
import numpy as np
from jax.experimental import pallas as pl
from jax.experimental.pallas import tpu as pltpu


def _layer_norm(x, w, b, eps=1e-5):
    mean = jnp.mean(x, axis=-1, keepdims=True)
    var = jnp.mean(jnp.square(x - mean), axis=-1, keepdims=True)
    return (x - mean) * jax.lax.rsqrt(var + eps) * w + b


# ---------------------------------------------------------------------------
# Pallas kernel: one encoder layer for one batch sample.
# grid = (B, num_layers); weights are streamed per layer, the activation is
# carried across the layer axis in a persistent VMEM scratch.
# ---------------------------------------------------------------------------
def _informer_layer_kernel(n_heads, x_ref, w_qkv_ref, w_out_ref, w_ff1_ref,
                           b_ff1_ref, w_ff2_ref, vec_ref, out_ref, x_sc):
    layer = pl.program_id(1)

    @pl.when(layer == 0)
    def _():
        x_sc[...] = x_ref[0].astype(jnp.float32)

    L, D = x_sc.shape
    d_k = D // n_heads

    x = x_sc[...]                                  # (L, D) f32 running activation
    x_bf = x.astype(jnp.bfloat16)

    vec = vec_ref[0]                               # (9, D) f32 packed vectors
    bq, bk, bv, bo, b2 = vec[0:1], vec[1:2], vec[2:3], vec[3:4], vec[4:5]
    ln1_w, ln1_b, ln2_w, ln2_b = vec[5:6], vec[6:7], vec[7:8], vec[8:9]

    # ---- multi-head self-attention (dense softmax; bf16 MXU, f32 acc) ------
    # 1/sqrt(d_k) is pre-folded into wq / bq.
    q = jnp.dot(x_bf, w_qkv_ref[0, 0], preferred_element_type=jnp.float32) + bq
    k = jnp.dot(x_bf, w_qkv_ref[0, 1], preferred_element_type=jnp.float32) + bk
    v = jnp.dot(x_bf, w_qkv_ref[0, 2], preferred_element_type=jnp.float32) + bv

    acc = jnp.zeros((L, D), jnp.float32)
    for h in range(n_heads):
        sl = slice(h * d_k, (h + 1) * d_k)
        qh = q[:, sl].astype(jnp.bfloat16)
        kh = k[:, sl].astype(jnp.bfloat16)
        vh = v[:, sl].astype(jnp.bfloat16)
        # q @ k^T contracting last dims of both -> no transpose materialized.
        s = jax.lax.dot_general(qh, kh, (((1,), (1,)), ((), ())),
                                preferred_element_type=jnp.float32)   # (L, L)
        m = jnp.max(s, axis=-1, keepdims=True)
        e = jnp.exp(s - m)
        p = e * pl.reciprocal(jnp.sum(e, axis=-1, keepdims=True), approx=True)
        ctx_h = jnp.dot(p.astype(jnp.bfloat16), vh,
                        preferred_element_type=jnp.float32)           # (L, d_k)
        # Project each head straight through its (d_k, D) slice of W_o
        # (head-major leading-dim index) -- no lane-axis concat.
        acc = acc + jnp.dot(ctx_h.astype(jnp.bfloat16), w_out_ref[0, h],
                            preferred_element_type=jnp.float32)
    attn_out = acc + bo

    # TODO(synk): nn.Dropout(p=0.3) layers are identity in eval mode (omitted).
    x = _layer_norm(x + attn_out, ln1_w, ln1_b)

    # ---- feed-forward: Linear(D, 4D) -> ReLU -> Linear(4D, D) --------------
    h1 = jnp.maximum(
        jnp.dot(x.astype(jnp.bfloat16), w_ff1_ref[0],
                preferred_element_type=jnp.float32) + b_ff1_ref[0], 0.0)
    ff = jnp.dot(h1.astype(jnp.bfloat16), w_ff2_ref[0],
                 preferred_element_type=jnp.float32) + b2
    x = _layer_norm(x + ff, ln2_w, ln2_b)

    x_sc[...] = x

    @pl.when(layer == pl.num_programs(1) - 1)
    def _():
        out_ref[0] = x.astype(out_ref.dtype)


# ---------------------------------------------------------------------------
# One-time parameter layout preparation (transposes, scale folding, stacking,
# bf16 cast) -- done once, not per call.
# ---------------------------------------------------------------------------
def prepare_inputs(params, *, n_heads, weight_dtype=jnp.bfloat16):
    layers = params["layers"]
    D = layers[0]["wq"].shape[0]
    d_k = D // n_heads
    scale = 1.0 / float(np.sqrt(d_k))

    w_qkv = jnp.stack([
        jnp.stack([l["wq"].T * scale, l["wk"].T, l["wv"].T]) for l in layers
    ]).astype(weight_dtype)                                    # (NL, 3, D, D)
    # W_o^T stored head-major so per-head slices are leading-dim indices.
    w_out = jnp.stack([
        l["wo"].T.reshape(n_heads, d_k, D) for l in layers
    ]).astype(weight_dtype)                                    # (NL, H, d_k, D)
    w_ff1 = jnp.stack([l["w1"].T for l in layers]).astype(weight_dtype)   # (NL, D, 4D)
    w_ff2 = jnp.stack([l["w2"].T for l in layers]).astype(weight_dtype)   # (NL, 4D, D)
    b_ff1 = jnp.stack([l["b1"].reshape(1, -1) for l in layers]
                      ).astype(jnp.float32)                    # (NL, 1, 4D)
    vec = jnp.stack([
        jnp.stack([l["bq"] * scale, l["bk"], l["bv"], l["bo"], l["b2"],
                   l["ln1_w"], l["ln1_b"], l["ln2_w"], l["ln2_b"]])
        for l in layers]).astype(jnp.float32)                  # (NL, 9, D)
    return w_qkv, w_out, w_ff1, b_ff1, w_ff2, vec


# ---------------------------------------------------------------------------
# Wrapper
# ---------------------------------------------------------------------------
def informer_encoder_forward(x, prepared, *, n_heads):
    """x: (B, L, d_model) float32 -> (B, L, d_model) float32."""
    w_qkv, w_out, w_ff1, b_ff1, w_ff2, vec = prepared
    B, L, D = x.shape
    NL = w_qkv.shape[0]
    D4 = w_ff1.shape[-1]
    d_k = D // n_heads
    x = x.astype(jnp.float32)

    in_specs = [
        pl.BlockSpec((1, L, D), lambda b, l: (b, 0, 0)),           # x (per batch)
        pl.BlockSpec((1, 3, D, D), lambda b, l: (l, 0, 0, 0)),     # wq/wk/wv
        pl.BlockSpec((1, n_heads, d_k, D), lambda b, l: (l, 0, 0, 0)),  # wo (head-major)
        pl.BlockSpec((1, D, D4), lambda b, l: (l, 0, 0)),          # w1
        pl.BlockSpec((1, 1, D4), lambda b, l: (l, 0, 0)),          # b1
        pl.BlockSpec((1, D4, D), lambda b, l: (l, 0, 0)),          # w2
        pl.BlockSpec((1, 9, D), lambda b, l: (l, 0, 0)),           # packed 1-D params
    ]
    out_spec = pl.BlockSpec((1, L, D), lambda b, l: (b, 0, 0))

    flops = B * NL * (24 * L * D * D + 4 * L * L * D)
    transcendentals = B * NL * (n_heads * L * (L + 1) + 2 * L)
    bytes_accessed = int(2 * x.nbytes + w_qkv.nbytes + w_out.nbytes
                         + w_ff1.nbytes + b_ff1.nbytes + w_ff2.nbytes
                         + vec.nbytes)

    kernel = functools.partial(_informer_layer_kernel, n_heads)
    return pl.pallas_call(
        kernel,
        out_shape=jax.ShapeDtypeStruct((B, L, D), jnp.float32),
        grid=(B, NL),
        in_specs=in_specs,
        out_specs=out_spec,
        scratch_shapes=[pltpu.VMEM((L, D), jnp.float32)],   # activation carry
        compiler_params=pltpu.CompilerParams(
            dimension_semantics=("parallel", "arbitrary"),
            vmem_limit_bytes=48 * 1024 * 1024),
        cost_estimate=pl.CostEstimate(
            flops=int(flops), transcendentals=int(transcendentals),
            bytes_accessed=bytes_accessed),
    )(x, w_qkv, w_out, w_ff1, b_ff1, w_ff2, vec)


# ---------------------------------------------------------------------------
# Pure-JAX reference (mirrors the PyTorch forward, eval mode, f32)
# ---------------------------------------------------------------------------
def reference_forward(x, params, *, n_heads):
    B, L, D = x.shape
    d_k = D // n_heads

    def layer_norm(y, w, b, eps=1e-5):
        mean = jnp.mean(y, axis=-1, keepdims=True)
        var = jnp.mean(jnp.square(y - mean), axis=-1, keepdims=True)
        return (y - mean) / jnp.sqrt(var + eps) * w + b

    for layer in params["layers"]:
        q = x @ layer["wq"].T + layer["bq"]
        k = x @ layer["wk"].T + layer["bk"]
        v = x @ layer["wv"].T + layer["bv"]
        q = q.reshape(B, L, n_heads, d_k).transpose(0, 2, 1, 3)
        k = k.reshape(B, L, n_heads, d_k).transpose(0, 2, 1, 3)
        v = v.reshape(B, L, n_heads, d_k).transpose(0, 2, 1, 3)
        scores = jnp.einsum("bhqd,bhkd->bhqk", q, k) / np.sqrt(d_k)
        attn = jax.nn.softmax(scores, axis=-1)
        ctx = jnp.einsum("bhqk,bhkd->bhqd", attn, v)
        ctx = ctx.transpose(0, 2, 1, 3).reshape(B, L, D)
        attn_out = ctx @ layer["wo"].T + layer["bo"]
        x = layer_norm(x + attn_out, layer["ln1_w"], layer["ln1_b"])
        h1 = jax.nn.relu(x @ layer["w1"].T + layer["b1"])
        ff = h1 @ layer["w2"].T + layer["b2"]
        x = layer_norm(x + ff, layer["ln2_w"], layer["ln2_b"])
    return x


# ---------------------------------------------------------------------------
# Deterministic parameter construction (PyTorch __init__ shapes)
# ---------------------------------------------------------------------------
def make_params(key, d_model, n_heads, num_layers):
    D = d_model
    s = 1.0 / np.sqrt(D)
    s4 = 1.0 / np.sqrt(4 * D)
    params = {"layers": []}
    for _ in range(num_layers):
        keys = jax.random.split(key, 17)
        key = keys[0]
        u = jax.random.uniform
        layer = {
            "wq": u(keys[1], (D, D), jnp.float32, -s, s),
            "bq": u(keys[2], (D,), jnp.float32, -s, s),
            "wk": u(keys[3], (D, D), jnp.float32, -s, s),
            "bk": u(keys[4], (D,), jnp.float32, -s, s),
            "wv": u(keys[5], (D, D), jnp.float32, -s, s),
            "bv": u(keys[6], (D,), jnp.float32, -s, s),
            "wo": u(keys[7], (D, D), jnp.float32, -s, s),
            "bo": u(keys[8], (D,), jnp.float32, -s, s),
            "ln1_w": 1.0 + 0.1 * jax.random.normal(keys[9], (D,), jnp.float32),
            "ln1_b": 0.1 * jax.random.normal(keys[10], (D,), jnp.float32),
            "w1": u(keys[11], (4 * D, D), jnp.float32, -s, s),
            "b1": u(keys[12], (4 * D,), jnp.float32, -s, s),
            "w2": u(keys[13], (D, 4 * D), jnp.float32, -s4, s4),
            "b2": u(keys[14], (D,), jnp.float32, -s4, s4),
            "ln2_w": 1.0 + 0.1 * jax.random.normal(keys[15], (D,), jnp.float32),
            "ln2_b": 0.1 * jax.random.normal(keys[16], (D,), jnp.float32),
        }
        params["layers"].append(layer)
    return params


if __name__ == "__main__":
    batch, seq_len = 2, 8
    d_model, n_heads, num_layers = 32, 4, 2

    key = jax.random.PRNGKey(0)
    key, kx = jax.random.split(key)
    x = jax.random.normal(kx, (batch, seq_len, d_model), jnp.float32)
    params = make_params(key, d_model, n_heads, num_layers)

    prepared = prepare_inputs(params, n_heads=n_heads)  # one-time layout prep
    out = informer_encoder_forward(x, prepared, n_heads=n_heads)
    out = jax.block_until_ready(out)

    ref = jax.block_until_ready(reference_forward(x, params, n_heads=n_heads))

    assert out.shape == (batch, seq_len, d_model), out.shape
    # bf16 MXU operands (f32 accumulation / f32 LN & softmax) -> looser
    # tolerance than a pure-f32 kernel, as flagged in the perf review.
    np.testing.assert_allclose(np.asarray(out), np.asarray(ref),
                               rtol=5e-2, atol=5e-2)
    print("KERNEL_OK")
</pallas_src>

<mosaic_0001>
module attributes {stable_mosaic.version = 11 : i64} {
  func.func @_informer_layer_kernel(%arg0: i32, %arg1: i32, %arg2: memref<1x8x32xf32, #tpu.memory_space<vmem>>, %arg3: memref<1x3x32x32xbf16, #tpu.memory_space<vmem>>, %arg4: memref<1x4x8x32xbf16, #tpu.memory_space<vmem>>, %arg5: memref<1x32x128xbf16, #tpu.memory_space<vmem>>, %arg6: memref<1x1x128xf32, #tpu.memory_space<vmem>>, %arg7: memref<1x128x32xbf16, #tpu.memory_space<vmem>>, %arg8: memref<1x9x32xf32, #tpu.memory_space<vmem>>, %arg9: memref<1x8x32xf32, #tpu.memory_space<vmem>>, %arg10: memref<8x32xf32, #tpu.memory_space<vmem>>) attributes {dimension_semantics = [#tpu.dimension_semantics<parallel>, #tpu.dimension_semantics<arbitrary>], iteration_bounds = array<i64: 2, 2>, scalar_prefetch = 0 : i64, scratch_operands = 1 : i64, tpu.core_type = #tpu.core_type<tc>, window_params = [{transform_indices = @transform_0, window_bounds = array<i64: 1, 8, 32>}, {transform_indices = @transform_1, window_bounds = array<i64: 1, 3, 32, 32>}, {transform_indices = @transform_2, window_bounds = array<i64: 1, 4, 8, 32>}, {transform_indices = @transform_3, window_bounds = array<i64: 1, 32, 128>}, {transform_indices = @transform_4, window_bounds = array<i64: 1, 1, 128>}, {transform_indices = @transform_5, window_bounds = array<i64: 1, 128, 32>}, {transform_indices = @transform_6, window_bounds = array<i64: 1, 9, 32>}, {transform_indices = @transform_7, window_bounds = array<i64: 1, 8, 32>}]} {
    %c0_i32 = arith.constant 0 : i32
    %0 = arith.cmpi eq, %arg1, %c0_i32 : i32
    %1 = arith.extui %0 : i1 to i32
    %c0_i32_0 = arith.constant 0 : i32
    %2 = arith.cmpi ne, %1, %c0_i32_0 : i32
    scf.if %2 {
      %c0_78 = arith.constant 0 : index
      %c0_79 = arith.constant 0 : index
      %c0_80 = arith.constant 0 : index
      %196 = vector.load %arg2[%c0_78, %c0_79, %c0_80] : memref<1x8x32xf32, #tpu.memory_space<vmem>>, vector<1x8x32xf32>
      %197 = vector.shape_cast %196 : vector<1x8x32xf32> to vector<8x32xf32>
      %c0_81 = arith.constant 0 : index
      %c0_82 = arith.constant 0 : index
      %198 = vector.load %arg10[%c0_81, %c0_82] : memref<8x32xf32, #tpu.memory_space<vmem>>, vector<8x32xf32>
      tpu.vector_store %arg10[%c0_81, %c0_82], %197 {strides = array<i32>} : memref<8x32xf32, #tpu.memory_space<vmem>>, vector<8x32xf32>,
    } else {
    }
    %c0 = arith.constant 0 : index
    %c0_1 = arith.constant 0 : index
    %3 = vector.load %arg10[%c0, %c0_1] : memref<8x32xf32, #tpu.memory_space<vmem>>, vector<8x32xf32>
    %4 = arith.truncf %3 : vector<8x32xf32> to vector<8x32xbf16>
    %c0_2 = arith.constant 0 : index
    %c0_3 = arith.constant 0 : index
    %c0_4 = arith.constant 0 : index
    %5 = vector.load %arg8[%c0_2, %c0_3, %c0_4] : memref<1x9x32xf32, #tpu.memory_space<vmem>>, vector<1x9x32xf32>
    %6 = vector.shape_cast %5 : vector<1x9x32xf32> to vector<9x32xf32>
    %7 = vector.extract_strided_slice %6 {offsets = [0, 0], sizes = [1, 32], strides = [1, 1]} : vector<9x32xf32> to vector<1x32xf32>
    %8 = vector.extract_strided_slice %6 {offsets = [1, 0], sizes = [1, 32], strides = [1, 1]} : vector<9x32xf32> to vector<1x32xf32>
    %9 = vector.extract_strided_slice %6 {offsets = [2, 0], sizes = [1, 32], strides = [1, 1]} : vector<9x32xf32> to vector<1x32xf32>
    %10 = vector.extract_strided_slice %6 {offsets = [3, 0], sizes = [1, 32], strides = [1, 1]} : vector<9x32xf32> to vector<1x32xf32>
    %11 = vector.extract_strided_slice %6 {offsets = [4, 0], sizes = [1, 32], strides = [1, 1]} : vector<9x32xf32> to vector<1x32xf32>
    %12 = vector.extract_strided_slice %6 {offsets = [5, 0], sizes = [1, 32], strides = [1, 1]} : vector<9x32xf32> to vector<1x32xf32>
    %13 = vector.extract_strided_slice %6 {offsets = [6, 0], sizes = [1, 32], strides = [1, 1]} : vector<9x32xf32> to vector<1x32xf32>
    %14 = vector.extract_strided_slice %6 {offsets = [7, 0], sizes = [1, 32], strides = [1, 1]} : vector<9x32xf32> to vector<1x32xf32>
    %15 = vector.extract_strided_slice %6 {offsets = [8, 0], sizes = [1, 32], strides = [1, 1]} : vector<9x32xf32> to vector<1x32xf32>
    %c0_5 = arith.constant 0 : index
    %c0_6 = arith.constant 0 : index
    %c0_7 = arith.constant 0 : index
    %c0_8 = arith.constant 0 : index
    %16 = vector.load %arg3[%c0_5, %c0_6, %c0_7, %c0_8] : memref<1x3x32x32xbf16, #tpu.memory_space<vmem>>, vector<1x1x32x32xbf16>
    %17 = vector.shape_cast %16 : vector<1x1x32x32xbf16> to vector<32x32xbf16>
    %cst = arith.constant dense<0.000000e+00> : vector<8x32xf32>
    %18 = tpu.matmul %4, %17, %cst {dimension_numbers = #tpu.dot_dimension_numbers<[1], [0], [0], [1], [0, 0, 1, 1], [], []>} : vector<8x32xbf16>, vector<32x32xbf16>, vector<8x32xf32> -> vector<8x32xf32>
    %19 = vector.broadcast %7 : vector<1x32xf32> to vector<8x32xf32>
    %20 = arith.addf %18, %19 : vector<8x32xf32>
    %c0_9 = arith.constant 0 : index
    %c1 = arith.constant 1 : index
    %c0_10 = arith.constant 0 : index
    %c0_11 = arith.constant 0 : index
    %21 = vector.load %arg3[%c0_9, %c1, %c0_10, %c0_11] : memref<1x3x32x32xbf16, #tpu.memory_space<vmem>>, vector<1x1x32x32xbf16>
    %22 = vector.shape_cast %21 : vector<1x1x32x32xbf16> to vector<32x32xbf16>
    %cst_12 = arith.constant dense<0.000000e+00> : vector<8x32xf32>
    %23 = tpu.matmul %4, %22, %cst_12 {dimension_numbers = #tpu.dot_dimension_numbers<[1], [0], [0], [1], [0, 0, 1, 1], [], []>} : vector<8x32xbf16>, vector<32x32xbf16>, vector<8x32xf32> -> vector<8x32xf32>
    %24 = vector.broadcast %8 : vector<1x32xf32> to vector<8x32xf32>
    %25 = arith.addf %23, %24 : vector<8x32xf32>
    %c0_13 = arith.constant 0 : index
    %c2 = arith.constant 2 : index
    %c0_14 = arith.constant 0 : index
    %c0_15 = arith.constant 0 : index
    %26 = vector.load %arg3[%c0_13, %c2, %c0_14, %c0_15] : memref<1x3x32x32xbf16, #tpu.memory_space<vmem>>, vector<1x1x32x32xbf16>
    %27 = vector.shape_cast %26 : vector<1x1x32x32xbf16> to vector<32x32xbf16>
    %cst_16 = arith.constant dense<0.000000e+00> : vector<8x32xf32>
    %28 = tpu.matmul %4, %27, %cst_16 {dimension_numbers = #tpu.dot_dimension_numbers<[1], [0], [0], [1], [0, 0, 1, 1], [], []>} : vector<8x32xbf16>, vector<32x32xbf16>, vector<8x32xf32> -> vector<8x32xf32>
    %29 = vector.broadcast %9 : vector<1x32xf32> to vector<8x32xf32>
    %30 = arith.addf %28, %29 : vector<8x32xf32>
    %cst_17 = arith.constant 0.000000e+00 : f32
    %31 = vector.broadcast %cst_17 : f32 to vector<8x32xf32>
    %32 = vector.extract_strided_slice %20 {offsets = [0, 0], sizes = [8, 8], strides = [1, 1]} : vector<8x32xf32> to vector<8x8xf32>
    %33 = arith.truncf %32 : vector<8x8xf32> to vector<8x8xbf16>
    %34 = vector.extract_strided_slice %25 {offsets = [0, 0], sizes = [8, 8], strides = [1, 1]} : vector<8x32xf32> to vector<8x8xf32>
    %35 = arith.truncf %34 : vector<8x8xf32> to vector<8x8xbf16>
    %36 = vector.extract_strided_slice %30 {offsets = [0, 0], sizes = [8, 8], strides = [1, 1]} : vector<8x32xf32> to vector<8x8xf32>
    %37 = arith.truncf %36 : vector<8x8xf32> to vector<8x8xbf16>
    %cst_18 = arith.constant dense<0.000000e+00> : vector<8x8xf32>
    %38 = tpu.matmul %33, %35, %cst_18 {dimension_numbers = #tpu.dot_dimension_numbers<[1], [1], [0], [0], [0, 0, 1, 0], [], []>} : vector<8x8xbf16>, vector<8x8xbf16>, vector<8x8xf32> -> vector<8x8xf32>
    %cst_19 = arith.constant dense<0xFF800000> : vector<8xf32>
    %39 = vector.multi_reduction <maximumf>, %38, %cst_19 [1] : vector<8x8xf32> to vector<8xf32>
    %40 = vector.shape_cast %39 : vector<8xf32> to vector<8x1xf32>
    %41 = vector.broadcast %40 : vector<8x1xf32> to vector<8x8xf32>
    %42 = arith.subf %38, %41 : vector<8x8xf32>
    %43 = math.exp %42 : vector<8x8xf32>
    %cst_20 = arith.constant dense<0.000000e+00> : vector<8xf32>
    %44 = vector.multi_reduction <add>, %43, %cst_20 [1] : vector<8x8xf32> to vector<8xf32>
    %45 = vector.shape_cast %44 : vector<8xf32> to vector<8x1xf32>
    %46 = tpu.reciprocal %45 {approx = true} : vector<8x1xf32> -> vector<8x1xf32>
    %47 = vector.broadcast %46 : vector<8x1xf32> to vector<8x8xf32>
    %48 = arith.mulf %43, %47 : vector<8x8xf32>
    %49 = arith.truncf %48 : vector<8x8xf32> to vector<8x8xbf16>
    %cst_21 = arith.constant dense<0.000000e+00> : vector<8x8xf32>
    %50 = tpu.matmul %49, %37, %cst_21 {dimension_numbers = #tpu.dot_dimension_numbers<[1], [0], [0], [1], [0, 0, 1, 1], [], []>} : vector<8x8xbf16>, vector<8x8xbf16>, vector<8x8xf32> -> vector<8x8xf32>
    %51 = arith.truncf %50 : vector<8x8xf32> to vector<8x8xbf16>
    %c0_22 = arith.constant 0 : index
    %c0_23 = arith.constant 0 : index
    %c0_24 = arith.constant 0 : index
    %c0_25 = arith.constant 0 : index
    %52 = vector.load %arg4[%c0_22, %c0_23, %c0_24, %c0_25] : memref<1x4x8x32xbf16, #tpu.memory_space<vmem>>, vector<1x1x8x32xbf16>
    %53 = vector.shape_cast %52 : vector<1x1x8x32xbf16> to vector<8x32xbf16>
    %cst_26 = arith.constant dense<0.000000e+00> : vector<8x32xf32>
    %54 = tpu.matmul %51, %53, %cst_26 {dimension_numbers = #tpu.dot_dimension_numbers<[1], [0], [0], [1], [0, 0, 1, 1], [], []>} : vector<8x8xbf16>, vector<8x32xbf16>, vector<8x32xf32> -> vector<8x32xf32>
    %55 = arith.addf %31, %54 : vector<8x32xf32>
    %56 = vector.extract_strided_slice %20 {offsets = [0, 8], sizes = [8, 8], strides = [1, 1]} : vector<8x32xf32> to vector<8x8xf32>
    %57 = arith.truncf %56 : vector<8x8xf32> to vector<8x8xbf16>
    %58 = vector.extract_strided_slice %25 {offsets = [0, 8], sizes = [8, 8], strides = [1, 1]} : vector<8x32xf32> to vector<8x8xf32>
    %59 = arith.truncf %58 : vector<8x8xf32> to vector<8x8xbf16>
    %60 = vector.extract_strided_slice %30 {offsets = [0, 8], sizes = [8, 8], strides = [1, 1]} : vector<8x32xf32> to vector<8x8xf32>
    %61 = arith.truncf %60 : vector<8x8xf32> to vector<8x8xbf16>
    %cst_27 = arith.constant dense<0.000000e+00> : vector<8x8xf32>
    %62 = tpu.matmul %57, %59, %cst_27 {dimension_numbers = #tpu.dot_dimension_numbers<[1], [1], [0], [0], [0, 0, 1, 0], [], []>} : vector<8x8xbf16>, vector<8x8xbf16>, vector<8x8xf32> -> vector<8x8xf32>
    %cst_28 = arith.constant dense<0xFF800000> : vector<8xf32>
    %63 = vector.multi_reduction <maximumf>, %62, %cst_28 [1] : vector<8x8xf32> to vector<8xf32>
    %64 = vector.shape_cast %63 : vector<8xf32> to vector<8x1xf32>
    %65 = vector.broadcast %64 : vector<8x1xf32> to vector<8x8xf32>
    %66 = arith.subf %62, %65 : vector<8x8xf32>
    %67 = math.exp %66 : vector<8x8xf32>
    %cst_29 = arith.constant dense<0.000000e+00> : vector<8xf32>
    %68 = vector.multi_reduction <add>, %67, %cst_29 [1] : vector<8x8xf32> to vector<8xf32>
    %69 = vector.shape_cast %68 : vector<8xf32> to vector<8x1xf32>
    %70 = tpu.reciprocal %69 {approx = true} : vector<8x1xf32> -> vector<8x1xf32>
    %71 = vector.broadcast %70 : vector<8x1xf32> to vector<8x8xf32>
    %72 = arith.mulf %67, %71 : vector<8x8xf32>
    %73 = arith.truncf %72 : vector<8x8xf32> to vector<8x8xbf16>
    %cst_30 = arith.constant dense<0.000000e+00> : vector<8x8xf32>
    %74 = tpu.matmul %73, %61, %cst_30 {dimension_numbers = #tpu.dot_dimension_numbers<[1], [0], [0], [1], [0, 0, 1, 1], [], []>} : vector<8x8xbf16>, vector<8x8xbf16>, vector<8x8xf32> -> vector<8x8xf32>
    %75 = arith.truncf %74 : vector<8x8xf32> to vector<8x8xbf16>
    %c0_31 = arith.constant 0 : index
    %c1_32 = arith.constant 1 : index
    %c0_33 = arith.constant 0 : index
    %c0_34 = arith.constant 0 : index
    %76 = vector.load %arg4[%c0_31, %c1_32, %c0_33, %c0_34] : memref<1x4x8x32xbf16, #tpu.memory_space<vmem>>, vector<1x1x8x32xbf16>
    %77 = vector.shape_cast %76 : vector<1x1x8x32xbf16> to vector<8x32xbf16>
    %cst_35 = arith.constant dense<0.000000e+00> : vector<8x32xf32>
    %78 = tpu.matmul %75, %77, %cst_35 {dimension_numbers = #tpu.dot_dimension_numbers<[1], [0], [0], [1], [0, 0, 1, 1], [], []>} : vector<8x8xbf16>, vector<8x32xbf16>, vector<8x32xf32> -> vector<8x32xf32>
    %79 = arith.addf %55, %78 : vector<8x32xf32>
    %80 = vector.extract_strided_slice %20 {offsets = [0, 16], sizes = [8, 8], strides = [1, 1]} : vector<8x32xf32> to vector<8x8xf32>
    %81 = arith.truncf %80 : vector<8x8xf32> to vector<8x8xbf16>
    %82 = vector.extract_strided_slice %25 {offsets = [0, 16], sizes = [8, 8], strides = [1, 1]} : vector<8x32xf32> to vector<8x8xf32>
    %83 = arith.truncf %82 : vector<8x8xf32> to vector<8x8xbf16>
    %84 = vector.extract_strided_slice %30 {offsets = [0, 16], sizes = [8, 8], strides = [1, 1]} : vector<8x32xf32> to vector<8x8xf32>
    %85 = arith.truncf %84 : vector<8x8xf32> to vector<8x8xbf16>
    %cst_36 = arith.constant dense<0.000000e+00> : vector<8x8xf32>
    %86 = tpu.matmul %81, %83, %cst_36 {dimension_numbers = #tpu.dot_dimension_numbers<[1], [1], [0], [0], [0, 0, 1, 0], [], []>} : vector<8x8xbf16>, vector<8x8xbf16>, vector<8x8xf32> -> vector<8x8xf32>
    %cst_37 = arith.constant dense<0xFF800000> : vector<8xf32>
    %87 = vector.multi_reduction <maximumf>, %86, %cst_37 [1] : vector<8x8xf32> to vector<8xf32>
    %88 = vector.shape_cast %87 : vector<8xf32> to vector<8x1xf32>
    %89 = vector.broadcast %88 : vector<8x1xf32> to vector<8x8xf32>
    %90 = arith.subf %86, %89 : vector<8x8xf32>
    %91 = math.exp %90 : vector<8x8xf32>
    %cst_38 = arith.constant dense<0.000000e+00> : vector<8xf32>
    %92 = vector.multi_reduction <add>, %91, %cst_38 [1] : vector<8x8xf32> to vector<8xf32>
    %93 = vector.shape_cast %92 : vector<8xf32> to vector<8x1xf32>
    %94 = tpu.reciprocal %93 {approx = true} : vector<8x1xf32> -> vector<8x1xf32>
    %95 = vector.broadcast %94 : vector<8x1xf32> to vector<8x8xf32>
    %96 = arith.mulf %91, %95 : vector<8x8xf32>
    %97 = arith.truncf %96 : vector<8x8xf32> to vector<8x8xbf16>
    %cst_39 = arith.constant dense<0.000000e+00> : vector<8x8xf32>
    %98 = tpu.matmul %97, %85, %cst_39 {dimension_numbers = #tpu.dot_dimension_numbers<[1], [0], [0], [1], [0, 0, 1, 1], [], []>} : vector<8x8xbf16>, vector<8x8xbf16>, vector<8x8xf32> -> vector<8x8xf32>
    %99 = arith.truncf %98 : vector<8x8xf32> to vector<8x8xbf16>
    %c0_40 = arith.constant 0 : index
    %c2_41 = arith.constant 2 : index
    %c0_42 = arith.constant 0 : index
    %c0_43 = arith.constant 0 : index
    %100 = vector.load %arg4[%c0_40, %c2_41, %c0_42, %c0_43] : memref<1x4x8x32xbf16, #tpu.memory_space<vmem>>, vector<1x1x8x32xbf16>
    %101 = vector.shape_cast %100 : vector<1x1x8x32xbf16> to vector<8x32xbf16>
    %cst_44 = arith.constant dense<0.000000e+00> : vector<8x32xf32>
    %102 = tpu.matmul %99, %101, %cst_44 {dimension_numbers = #tpu.dot_dimension_numbers<[1], [0], [0], [1], [0, 0, 1, 1], [], []>} : vector<8x8xbf16>, vector<8x32xbf16>, vector<8x32xf32> -> vector<8x32xf32>
    %103 = arith.addf %79, %102 : vector<8x32xf32>
    %104 = vector.extract_strided_slice %20 {offsets = [0, 24], sizes = [8, 8], strides = [1, 1]} : vector<8x32xf32> to vector<8x8xf32>
    %105 = arith.truncf %104 : vector<8x8xf32> to vector<8x8xbf16>
    %106 = vector.extract_strided_slice %25 {offsets = [0, 24], sizes = [8, 8], strides = [1, 1]} : vector<8x32xf32> to vector<8x8xf32>
    %107 = arith.truncf %106 : vector<8x8xf32> to vector<8x8xbf16>
    %108 = vector.extract_strided_slice %30 {offsets = [0, 24], sizes = [8, 8], strides = [1, 1]} : vector<8x32xf32> to vector<8x8xf32>
    %109 = arith.truncf %108 : vector<8x8xf32> to vector<8x8xbf16>
    %cst_45 = arith.constant dense<0.000000e+00> : vector<8x8xf32>
    %110 = tpu.matmul %105, %107, %cst_45 {dimension_numbers = #tpu.dot_dimension_numbers<[1], [1], [0], [0], [0, 0, 1, 0], [], []>} : vector<8x8xbf16>, vector<8x8xbf16>, vector<8x8xf32> -> vector<8x8xf32>
    %cst_46 = arith.constant dense<0xFF800000> : vector<8xf32>
    %111 = vector.multi_reduction <maximumf>, %110, %cst_46 [1] : vector<8x8xf32> to vector<8xf32>
    %112 = vector.shape_cast %111 : vector<8xf32> to vector<8x1xf32>
    %113 = vector.broadcast %112 : vector<8x1xf32> to vector<8x8xf32>
    %114 = arith.subf %110, %113 : vector<8x8xf32>
    %115 = math.exp %114 : vector<8x8xf32>
    %cst_47 = arith.constant dense<0.000000e+00> : vector<8xf32>
    %116 = vector.multi_reduction <add>, %115, %cst_47 [1] : vector<8x8xf32> to vector<8xf32>
    %117 = vector.shape_cast %116 : vector<8xf32> to vector<8x1xf32>
    %118 = tpu.reciprocal %117 {approx = true} : vector<8x1xf32> -> vector<8x1xf32>
    %119 = vector.broadcast %118 : vector<8x1xf32> to vector<8x8xf32>
    %120 = arith.mulf %115, %119 : vector<8x8xf32>
    %121 = arith.truncf %120 : vector<8x8xf32> to vector<8x8xbf16>
    %cst_48 = arith.constant dense<0.000000e+00> : vector<8x8xf32>
    %122 = tpu.matmul %121, %109, %cst_48 {dimension_numbers = #tpu.dot_dimension_numbers<[1], [0], [0], [1], [0, 0, 1, 1], [], []>} : vector<8x8xbf16>, vector<8x8xbf16>, vector<8x8xf32> -> vector<8x8xf32>
    %123 = arith.truncf %122 : vector<8x8xf32> to vector<8x8xbf16>
    %c0_49 = arith.constant 0 : index
    %c3 = arith.constant 3 : index
    %c0_50 = arith.constant 0 : index
    %c0_51 = arith.constant 0 : index
    %124 = vector.load %arg4[%c0_49, %c3, %c0_50, %c0_51] : memref<1x4x8x32xbf16, #tpu.memory_space<vmem>>, vector<1x1x8x32xbf16>
    %125 = vector.shape_cast %124 : vector<1x1x8x32xbf16> to vector<8x32xbf16>
    %cst_52 = arith.constant dense<0.000000e+00> : vector<8x32xf32>
    %126 = tpu.matmul %123, %125, %cst_52 {dimension_numbers = #tpu.dot_dimension_numbers<[1], [0], [0], [1], [0, 0, 1, 1], [], []>} : vector<8x8xbf16>, vector<8x32xbf16>, vector<8x32xf32> -> vector<8x32xf32>
    %127 = arith.addf %103, %126 : vector<8x32xf32>
    %128 = vector.broadcast %10 : vector<1x32xf32> to vector<8x32xf32>
    %129 = arith.addf %127, %128 : vector<8x32xf32>
    %130 = arith.addf %3, %129 : vector<8x32xf32>
    %cst_53 = arith.constant dense<0.000000e+00> : vector<8xf32>
    %131 = vector.multi_reduction <add>, %130, %cst_53 [1] : vector<8x32xf32> to vector<8xf32>
    %132 = vector.shape_cast %131 : vector<8xf32> to vector<8x1xf32>
    %cst_54 = arith.constant 3.200000e+01 : f32
    %133 = vector.broadcast %cst_54 : f32 to vector<8x1xf32>
    %134 = arith.divf %132, %133 : vector<8x1xf32>
    %135 = vector.broadcast %134 : vector<8x1xf32> to vector<8x32xf32>
    %136 = arith.subf %130, %135 : vector<8x32xf32>
    %137 = arith.mulf %136, %136 : vector<8x32xf32>
    %cst_55 = arith.constant dense<0.000000e+00> : vector<8xf32>
    %138 = vector.multi_reduction <add>, %137, %cst_55 [1] : vector<8x32xf32> to vector<8xf32>
    %139 = vector.shape_cast %138 : vector<8xf32> to vector<8x1xf32>
    %cst_56 = arith.constant 3.200000e+01 : f32
    %140 = vector.broadcast %cst_56 : f32 to vector<8x1xf32>
    %141 = arith.divf %139, %140 : vector<8x1xf32>
    %142 = vector.broadcast %134 : vector<8x1xf32> to vector<8x32xf32>
    %143 = arith.subf %130, %142 : vector<8x32xf32>
    %cst_57 = arith.constant 9.99999974E-6 : f32
    %144 = vector.broadcast %cst_57 : f32 to vector<8x1xf32>
    %145 = arith.addf %141, %144 : vector<8x1xf32>
    %146 = math.rsqrt %145 : vector<8x1xf32>
    %147 = vector.broadcast %146 : vector<8x1xf32> to vector<8x32xf32>
    %148 = arith.mulf %143, %147 : vector<8x32xf32>
    %149 = vector.broadcast %12 : vector<1x32xf32> to vector<8x32xf32>
    %150 = arith.mulf %148, %149 : vector<8x32xf32>
    %151 = vector.broadcast %13 : vector<1x32xf32> to vector<8x32xf32>
    %152 = arith.addf %150, %151 : vector<8x32xf32>
    %153 = arith.truncf %152 : vector<8x32xf32> to vector<8x32xbf16>
    %c0_58 = arith.constant 0 : index
    %c0_59 = arith.constant 0 : index
    %c0_60 = arith.constant 0 : index
    %154 = vector.load %arg5[%c0_58, %c0_59, %c0_60] : memref<1x32x128xbf16, #tpu.memory_space<vmem>>, vector<1x32x128xbf16>
    %155 = vector.shape_cast %154 : vector<1x32x128xbf16> to vector<32x128xbf16>
    %cst_61 = arith.constant dense<0.000000e+00> : vector<8x128xf32>
    %156 = tpu.matmul %153, %155, %cst_61 {dimension_numbers = #tpu.dot_dimension_numbers<[1], [0], [0], [1], [0, 0, 1, 1], [], []>} : vector<8x32xbf16>, vector<32x128xbf16>, vector<8x128xf32> -> vector<8x128xf32>
    %c0_62 = arith.constant 0 : index
    %c0_63 = arith.constant 0 : index
    %c0_64 = arith.constant 0 : index
    %157 = vector.load %arg6[%c0_62, %c0_63, %c0_64] : memref<1x1x128xf32, #tpu.memory_space<vmem>>, vector<1x1x128xf32>
    %158 = vector.shape_cast %157 : vector<1x1x128xf32> to vector<1x128xf32>
    %159 = vector.broadcast %158 : vector<1x128xf32> to vector<8x128xf32>
    %160 = arith.addf %156, %159 : vector<8x128xf32>
    %cst_65 = arith.constant 0.000000e+00 : f32
    %161 = vector.broadcast %cst_65 : f32 to vector<8x128xf32>
    %162 = arith.maximumf %160, %161 : vector<8x128xf32>
    %163 = arith.truncf %162 : vector<8x128xf32> to vector<8x128xbf16>
    %c0_66 = arith.constant 0 : index
    %c0_67 = arith.constant 0 : index
    %c0_68 = arith.constant 0 : index
    %164 = vector.load %arg7[%c0_66, %c0_67, %c0_68] : memref<1x128x32xbf16, #tpu.memory_space<vmem>>, vector<1x128x32xbf16>
    %165 = vector.shape_cast %164 : vector<1x128x32xbf16> to vector<128x32xbf16>
    %cst_69 = arith.constant dense<0.000000e+00> : vector<8x32xf32>
    %166 = tpu.matmul %163, %165, %cst_69 {dimension_numbers = #tpu.dot_dimension_numbers<[1], [0], [0], [1], [0, 0, 1, 1], [], []>} : vector<8x128xbf16>, vector<128x32xbf16>, vector<8x32xf32> -> vector<8x32xf32>
    %167 = vector.broadcast %11 : vector<1x32xf32> to vector<8x32xf32>
    %168 = arith.addf %166, %167 : vector<8x32xf32>
    %169 = arith.addf %152, %168 : vector<8x32xf32>
    %cst_70 = arith.constant dense<0.000000e+00> : vector<8xf32>
    %170 = vector.multi_reduction <add>, %169, %cst_70 [1] : vector<8x32xf32> to vector<8xf32>
    %171 = vector.shape_cast %170 : vector<8xf32> to vector<8x1xf32>
    %cst_71 = arith.constant 3.200000e+01 : f32
    %172 = vector.broadcast %cst_71 : f32 to vector<8x1xf32>
    %173 = arith.divf %171, %172 : vector<8x1xf32>
    %174 = vector.broadcast %173 : vector<8x1xf32> to vector<8x32xf32>
    %175 = arith.subf %169, %174 : vector<8x32xf32>
    %176 = arith.mulf %175, %175 : vector<8x32xf32>
    %cst_72 = arith.constant dense<0.000000e+00> : vector<8xf32>
    %177 = vector.multi_reduction <add>, %176, %cst_72 [1] : vector<8x32xf32> to vector<8xf32>
    %178 = vector.shape_cast %177 : vector<8xf32> to vector<8x1xf32>
    %cst_73 = arith.constant 3.200000e+01 : f32
    %179 = vector.broadcast %cst_73 : f32 to vector<8x1xf32>
    %180 = arith.divf %178, %179 : vector<8x1xf32>
    %181 = vector.broadcast %173 : vector<8x1xf32> to vector<8x32xf32>
    %182 = arith.subf %169, %181 : vector<8x32xf32>
    %cst_74 = arith.constant 9.99999974E-6 : f32
    %183 = vector.broadcast %cst_74 : f32 to vector<8x1xf32>
    %184 = arith.addf %180, %183 : vector<8x1xf32>
    %185 = math.rsqrt %184 : vector<8x1xf32>
    %186 = vector.broadcast %185 : vector<8x1xf32> to vector<8x32xf32>
    %187 = arith.mulf %182, %186 : vector<8x32xf32>
    %188 = vector.broadcast %14 : vector<1x32xf32> to vector<8x32xf32>
    %189 = arith.mulf %187, %188 : vector<8x32xf32>
    %190 = vector.broadcast %15 : vector<1x32xf32> to vector<8x32xf32>
    %191 = arith.addf %189, %190 : vector<8x32xf32>
    %c0_75 = arith.constant 0 : index
    %c0_76 = arith.constant 0 : index
    %192 = vector.load %arg10[%c0_75, %c0_76] : memref<8x32xf32, #tpu.memory_space<vmem>>, vector<8x32xf32>
    tpu.vector_store %arg10[%c0_75, %c0_76], %191 {strides = array<i32>} : memref<8x32xf32, #tpu.memory_space<vmem>>, vector<8x32xf32>,
    %c1_i32 = arith.constant 1 : i32
    %193 = arith.cmpi eq, %arg1, %c1_i32 : i32
    %194 = arith.extui %193 : i1 to i32
    %c0_i32_77 = arith.constant 0 : i32
    %195 = arith.cmpi ne, %194, %c0_i32_77 : i32
    scf.if %195 {
      %c0_78 = arith.constant 0 : index
      %c0_79 = arith.constant 0 : index
      %c0_80 = arith.constant 0 : index
      %196 = vector.load %arg9[%c0_78, %c0_79, %c0_80] : memref<1x8x32xf32, #tpu.memory_space<vmem>>, vector<1x8x32xf32>
      %197 = vector.shape_cast %196 : vector<1x8x32xf32> to vector<8x32xf32>
      %198 = vector.shape_cast %191 : vector<8x32xf32> to vector<1x8x32xf32>
      tpu.vector_store %arg9[%c0_78, %c0_79, %c0_80], %198 {strides = array<i32>} : memref<1x8x32xf32, #tpu.memory_space<vmem>>, vector<1x8x32xf32>,
    } else {
    }
    return
  }
  func.func @transform_0(%arg0: i32, %arg1: i32) -> (i32, i32, i32) {
    %c0_i32 = arith.constant 0 : i32
    %c0_i32_0 = arith.constant 0 : i32
    %c0_i32_1 = arith.constant 0 : i32
    return %arg0, %c0_i32, %c0_i32_0 : i32, i32, i32
  }
  func.func @transform_1(%arg0: i32, %arg1: i32) -> (i32, i32, i32, i32) {
    %c0_i32 = arith.constant 0 : i32
    %c0_i32_0 = arith.constant 0 : i32
    %c0_i32_1 = arith.constant 0 : i32
    %c0_i32_2 = arith.constant 0 : i32
    return %arg1, %c0_i32, %c0_i32_0, %c0_i32_1 : i32, i32, i32, i32
  }
  func.func @transform_2(%arg0: i32, %arg1: i32) -> (i32, i32, i32, i32) {
    %c0_i32 = arith.constant 0 : i32
    %c0_i32_0 = arith.constant 0 : i32
    %c0_i32_1 = arith.constant 0 : i32
    %c0_i32_2 = arith.constant 0 : i32
    return %arg1, %c0_i32, %c0_i32_0, %c0_i32_1 : i32, i32, i32, i32
  }
  func.func @transform_3(%arg0: i32, %arg1: i32) -> (i32, i32, i32) {
    %c0_i32 = arith.constant 0 : i32
    %c0_i32_0 = arith.constant 0 : i32
    %c0_i32_1 = arith.constant 0 : i32
    return %arg1, %c0_i32, %c0_i32_0 : i32, i32, i32
  }
  func.func @transform_4(%arg0: i32, %arg1: i32) -> (i32, i32, i32) {
    %c0_i32 = arith.constant 0 : i32
    %c0_i32_0 = arith.constant 0 : i32
    %c0_i32_1 = arith.constant 0 : i32
    return %arg1, %c0_i32, %c0_i32_0 : i32, i32, i32
  }
  func.func @transform_5(%arg0: i32, %arg1: i32) -> (i32, i32, i32) {
    %c0_i32 = arith.constant 0 : i32
    %c0_i32_0 = arith.constant 0 : i32
    %c0_i32_1 = arith.constant 0 : i32
    return %arg1, %c0_i32, %c0_i32_0 : i32, i32, i32
  }
  func.func @transform_6(%arg0: i32, %arg1: i32) -> (i32, i32, i32) {
    %c0_i32 = arith.constant 0 : i32
    %c0_i32_0 = arith.constant 0 : i32
    %c0_i32_1 = arith.constant 0 : i32
    return %arg1, %c0_i32, %c0_i32_0 : i32, i32, i32
  }
  func.func @transform_7(%arg0: i32, %arg1: i32) -> (i32, i32, i32) {
    %c0_i32 = arith.constant 0 : i32
    %c0_i32_0 = arith.constant 0 : i32
    %c0_i32_1 = arith.constant 0 : i32
    return %arg0, %c0_i32, %c0_i32_0 : i32, i32, i32
  }
}

</mosaic_0001>

<llo_original>
// kernel: tpu_custom_call.1
$region0: #{tpu_custom_call.1}
  #allocation0 [shape = 'u32[]', space=smem, size = 0x4, offset = 0x4, fixed_abs, tag = 'smem constant byte address 0x4 - core index']
  #allocation1 [shape = 'u32[144,128]{1,0:T(1,128)}', space=vmem, size = 0x12000, scoped, tag = 'internal scratch']
  #allocation2 [shape = 'f32[8,32]{1,0:T(8,128)}', space=vmem, size = 0x1000, scoped, tag = 'scratch operand']
  %s0 = inlined_call_operand.vmem [shape: f32[2,8,32], index: 0, kind: input, shape index: {}]
  %s1 = inlined_call_operand.vmem [shape: bf16[2,3,32,32], index: 1, kind: input, shape index: {}]
  %s2 = inlined_call_operand.vmem [shape: bf16[2,4,8,32], index: 2, kind: input, shape index: {}]
  %s3 = inlined_call_operand.vmem [shape: bf16[2,32,128], index: 3, kind: input, shape index: {}]
  %s4 = inlined_call_operand.vmem [shape: f32[2,1,128], index: 4, kind: input, shape index: {}]
  %s5 = inlined_call_operand.vmem [shape: bf16[2,128,32], index: 5, kind: input, shape index: {}]
  %s6 = inlined_call_operand.vmem [shape: f32[2,9,32], index: 6, kind: input, shape index: {}]
  %s7 = inlined_call_operand.hbm [shape: f32[2,8,32], index: 7, kind: output, shape index: {}]
  %s8 = sld [smem:[#allocation0]]
  $region69: #{tpu_custom_call.1} parent=0
    _
  %s10 = ssub.s32 1, %s8
  %s11 = scalar_select 0, %s10, %s8
  $region1: #{tpu_custom_call.1} parent=0
    #allocation3 [shape = 'u8[8192]{0}', space=vmem, size = 0x2000, scoped, tag = 'output window, operand 0']
    #allocation4 [shape = 's32[2]{0}', space=sflag, size = 0x8, scoped, tag = 'scoped memory for tpu_custom_call.1']
    %12 = vsyncpa [#allocation4], 0
    %s13 = scalar_lea.sflag [#allocation4], 1
    %14 = vsyncpa %s13, 0
    loop: start=0, step=1, limit=6
    $region2: #{tpu_custom_call.1} parent=1 // loop_pre_header
      _
    $region3: #{tpu_custom_call.1} parent=1 // loop_header
      %s16 = sphi 0, %s20
      %p17 = scmp.ge.s32.totalorder %s16, 6
      %s23 = sphi 0, %s35
      %s24 = sphi 0, %s31
      %s25 = sphi 0, %s23
      %s26 = sphi 0, %s24
      %s27 = sphi 0, %s25
      %s28 = sphi 0, %s26
      %s38 = sphi 0, %s40
      %s41 = sphi 0, %s38
      %s42 = sphi 0, %s41
      %s58 = sphi 0, %s42
      %s64 = sphi 0, %s66
      %s67 = sphi 0, %s64
      %s68 = sphi 0, %s67
      %s84 = sphi 0, %s68
      %s90 = sphi 0, %s92
      %s93 = sphi 0, %s90
      %s94 = sphi 0, %s93
      %s110 = sphi 0, %s94
      %s116 = sphi 0, %s118
      %s119 = sphi 0, %s116
      %s120 = sphi 0, %s119
      %s136 = sphi 0, %s120
      %s142 = sphi 0, %s144
      %s145 = sphi 0, %s142
      %s146 = sphi 0, %s145
      %s162 = sphi 0, %s146
      %s168 = sphi 0, %s170
      %s171 = sphi 0, %s168
      %s172 = sphi 0, %s171
      %s188 = sphi 0, %s172
      %s194 = sphi 0, %s196
      %s197 = sphi 0, %s194
      %s198 = sphi 0, %s197
      %s214 = sphi 0, %s198
      %s220 = sphi 0, %s222
      %s223 = sphi 0, %s220
      %s224 = sphi 0, %s223
      %s240 = sphi 0, %s224
    $region4: #{tpu_custom_call.1} parent=1 // loop_header_branch
      %19 = sbr.rel (%p17) target = $region8
    $region5: #{tpu_custom_call.1} parent=1 // loop_body
      %s21 = ssub.s32 %s16, 1
      %s22 = ssub.s32 %s16, 2
      %s29 = sadd.s32 1, %s24
      %p30 = scmp.ge.s32.totalorder %s29, 2
      %s31 = scalar_select %p30, 0, %s29
      %s32 = sadd.s32 1, %s23
      %s33 = scalar_select %p30, %s32, %s23
      %p34 = scmp.ge.s32.totalorder %s33, 2
      %s35 = scalar_select %p34, 0, %s33
      %s36 = ssub.s32 %s23, %s35
      %p37 = scmp.eq.s32.totalorder %s36, 0
      %s39 = sadd.s32 %s38, 1
      %s40 = scalar_select %p37, %s38, %s39
      %p43 = pneg %p37
      %p44 = scmp.eq.s32.totalorder %s16, 3
      %p45 = por %p43, %p44
      %p46 = scmp.ne.s32.totalorder %s38, %s41
      %p47 = scmp.eq.s32.totalorder %s16, 0
      %p48 = por %p46, %p47
      %p49 = scmp.ne.s32.totalorder %s38, %s41
      %p50 = scmp.eq.s32.totalorder %s21, 3
      %p51 = por %p49, %p50
      %p52 = scmp.ne.s32.totalorder %s41, %s42
      %p53 = scmp.eq.s32.totalorder %s21, 0
      %p54 = por %p52, %p53
      %p55 = scmp.ne.s32.totalorder %s41, %s42
      %p56 = scmp.eq.s32.totalorder %s22, 3
      %p57 = por %p55, %p56
      %p59 = scmp.ne.s32.totalorder %s42, %s58
      %p60 = scmp.eq.s32.totalorder %s22, 0
      %p61 = por %p59, %p60
      %s62 = ssub.s32 %s24, %s31
      %p63 = scmp.eq.s32.totalorder %s62, 0
      %s65 = sadd.s32 %s64, 1
      %s66 = scalar_select %p63, %s64, %s65
      %p69 = pneg %p63
      %p70 = scmp.eq.s32.totalorder %s16, 3
      %p71 = por %p69, %p70
      %p72 = scmp.ne.s32.totalorder %s64, %s67
      %p73 = scmp.eq.s32.totalorder %s16, 0
      %p74 = por %p72, %p73
      %p75 = scmp.ne.s32.totalorder %s64, %s67
      %p76 = scmp.eq.s32.totalorder %s21, 3
      %p77 = por %p75, %p76
      %p78 = scmp.ne.s32.totalorder %s67, %s68
      %p79 = scmp.eq.s32.totalorder %s21, 0
      %p80 = por %p78, %p79
      %p81 = scmp.ne.s32.totalorder %s67, %s68
      %p82 = scmp.eq.s32.totalorder %s22, 3
      %p83 = por %p81, %p82
      %p85 = scmp.ne.s32.totalorder %s68, %s84
      %p86 = scmp.eq.s32.totalorder %s22, 0
      %p87 = por %p85, %p86
      %s88 = ssub.s32 %s24, %s31
      %p89 = scmp.eq.s32.totalorder %s88, 0
      %s91 = sadd.s32 %s90, 1
      %s92 = scalar_select %p89, %s90, %s91
      %p95 = pneg %p89
      %p96 = scmp.eq.s32.totalorder %s16, 3
      %p97 = por %p95, %p96
      %p98 = scmp.ne.s32.totalorder %s90, %s93
      %p99 = scmp.eq.s32.totalorder %s16, 0
      %p100 = por %p98, %p99
      %p101 = scmp.ne.s32.totalorder %s90, %s93
      %p102 = scmp.eq.s32.totalorder %s21, 3
      %p103 = por %p101, %p102
      %p104 = scmp.ne.s32.totalorder %s93, %s94
      %p105 = scmp.eq.s32.totalorder %s21, 0
      %p106 = por %p104, %p105
      %p107 = scmp.ne.s32.totalorder %s93, %s94
      %p108 = scmp.eq.s32.totalorder %s22, 3
      %p109 = por %p107, %p108
      %p111 = scmp.ne.s32.totalorder %s94, %s110
      %p112 = scmp.eq.s32.totalorder %s22, 0
      %p113 = por %p111, %p112
      %s114 = ssub.s32 %s24, %s31
      %p115 = scmp.eq.s32.totalorder %s114, 0
      %s117 = sadd.s32 %s116, 1
      %s118 = scalar_select %p115, %s116, %s117
      %p121 = pneg %p115
      %p122 = scmp.eq.s32.totalorder %s16, 3
      %p123 = por %p121, %p122
      %p124 = scmp.ne.s32.totalorder %s116, %s119
      %p125 = scmp.eq.s32.totalorder %s16, 0
      %p126 = por %p124, %p125
      %p127 = scmp.ne.s32.totalorder %s116, %s119
      %p128 = scmp.eq.s32.totalorder %s21, 3
      %p129 = por %p127, %p128
      %p130 = scmp.ne.s32.totalorder %s119, %s120
      %p131 = scmp.eq.s32.totalorder %s21, 0
      %p132 = por %p130, %p131
      %p133 = scmp.ne.s32.totalorder %s119, %s120
      %p134 = scmp.eq.s32.totalorder %s22, 3
      %p135 = por %p133, %p134
      %p137 = scmp.ne.s32.totalorder %s120, %s136
      %p138 = scmp.eq.s32.totalorder %s22, 0
      %p139 = por %p137, %p138
      %s140 = ssub.s32 %s24, %s31
      %p141 = scmp.eq.s32.totalorder %s140, 0
      %s143 = sadd.s32 %s142, 1
      %s144 = scalar_select %p141, %s142, %s143
      %p147 = pneg %p141
      %p148 = scmp.eq.s32.totalorder %s16, 3
      %p149 = por %p147, %p148
      %p150 = scmp.ne.s32.totalorder %s142, %s145
      %p151 = scmp.eq.s32.totalorder %s16, 0
      %p152 = por %p150, %p151
      %p153 = scmp.ne.s32.totalorder %s142, %s145
      %p154 = scmp.eq.s32.totalorder %s21, 3
      %p155 = por %p153, %p154
      %p156 = scmp.ne.s32.totalorder %s145, %s146
      %p157 = scmp.eq.s32.totalorder %s21, 0
      %p158 = por %p156, %p157
      %p159 = scmp.ne.s32.totalorder %s145, %s146
      %p160 = scmp.eq.s32.totalorder %s22, 3
      %p161 = por %p159, %p160
      %p163 = scmp.ne.s32.totalorder %s146, %s162
      %p164 = scmp.eq.s32.totalorder %s22, 0
      %p165 = por %p163, %p164
      %s166 = ssub.s32 %s24, %s31
      %p167 = scmp.eq.s32.totalorder %s166, 0
      %s169 = sadd.s32 %s168, 1
      %s170 = scalar_select %p167, %s168, %s169
      %p173 = pneg %p167
      %p174 = scmp.eq.s32.totalorder %s16, 3
      %p175 = por %p173, %p174
      %p176 = scmp.ne.s32.totalorder %s168, %s171
      %p177 = scmp.eq.s32.totalorder %s16, 0
      %p178 = por %p176, %p177
      %p179 = scmp.ne.s32.totalorder %s168, %s171
      %p180 = scmp.eq.s32.totalorder %s21, 3
      %p181 = por %p179, %p180
      %p182 = scmp.ne.s32.totalorder %s171, %s172
      %p183 = scmp.eq.s32.totalorder %s21, 0
      %p184 = por %p182, %p183
      %p185 = scmp.ne.s32.totalorder %s171, %s172
      %p186 = scmp.eq.s32.totalorder %s22, 3
      %p187 = por %p185, %p186
      %p189 = scmp.ne.s32.totalorder %s172, %s188
      %p190 = scmp.eq.s32.totalorder %s22, 0
      %p191 = por %p189, %p190
      %s192 = ssub.s32 %s24, %s31
      %p193 = scmp.eq.s32.totalorder %s192, 0
      %s195 = sadd.s32 %s194, 1
      %s196 = scalar_select %p193, %s194, %s195
      %p199 = pneg %p193
      %p200 = scmp.eq.s32.totalorder %s16, 3
      %p201 = por %p199, %p200
      %p202 = scmp.ne.s32.totalorder %s194, %s197
      %p203 = scmp.eq.s32.totalorder %s16, 0
      %p204 = por %p202, %p203
      %p205 = scmp.ne.s32.totalorder %s194, %s197
      %p206 = scmp.eq.s32.totalorder %s21, 3
      %p207 = por %p205, %p206
      %p208 = scmp.ne.s32.totalorder %s197, %s198
      %p209 = scmp.eq.s32.totalorder %s21, 0
      %p210 = por %p208, %p209
      %p211 = scmp.ne.s32.totalorder %s197, %s198
      %p212 = scmp.eq.s32.totalorder %s22, 3
      %p213 = por %p211, %p212
      %p215 = scmp.ne.s32.totalorder %s198, %s214
      %p216 = scmp.eq.s32.totalorder %s22, 0
      %p217 = por %p215, %p216
      %s218 = ssub.s32 %s23, %s35
      %p219 = scmp.eq.s32.totalorder %s218, 0
      %s221 = sadd.s32 %s220, 1
      %s222 = scalar_select %p219, %s220, %s221
      %p225 = pneg %p219
      %p226 = scmp.eq.s32.totalorder %s16, 3
      %p227 = por %p225, %p226
      %p228 = scmp.ne.s32.totalorder %s220, %s223
      %p229 = scmp.eq.s32.totalorder %s16, 0
      %p230 = por %p228, %p229
      %p231 = scmp.ne.s32.totalorder %s220, %s223
      %p232 = scmp.eq.s32.totalorder %s21, 3
      %p233 = por %p231, %p232
      %p234 = scmp.ne.s32.totalorder %s223, %s224
      %p235 = scmp.eq.s32.totalorder %s21, 0
      %p236 = por %p234, %p235
      %p237 = scmp.ne.s32.totalorder %s223, %s224
      %p238 = scmp.eq.s32.totalorder %s22, 3
      %p239 = por %p237, %p238
      %p241 = scmp.ne.s32.totalorder %s224, %s240
      %p242 = scmp.eq.s32.totalorder %s22, 0
      %p243 = por %p241, %p242
      %p244 = scmp.le.s32.totalorder 1, %s16
      %p245 = scmp.lt.s32.totalorder %s16, 5
      %p246 = pnand %p244, %p245
      %p247 = pneg %p246
      // Predicated region
      $region9: #{tpu_custom_call.1} parent=5 // pred_check
        _
      $region10: #{tpu_custom_call.1} parent=5 // pred_check_branch
        %249 = sbr.rel (%p246) target = $region12
      $region11: #{tpu_custom_call.1} parent=5 // pred_region
        %s250 = ssub.s32 %s16, 1
      $region12: #{tpu_custom_call.1} parent=5 // pred_fallthru
        _
      %p251 = scmp.lt.s32.totalorder %s16, 4
      // Predicated region
      $region13: #{tpu_custom_call.1} parent=5 // pred_check
        %p252 = pneg %p251
      $region14: #{tpu_custom_call.1} parent=5 // pred_check_branch
        %254 = sbr.rel (%p252) target = $region16
      $region15: #{tpu_custom_call.1} parent=5 // pred_region
        // Predicated region
        $region17: #{tpu_custom_call.1} parent=15 // pred_check
          %p255 = pneg %p48
        $region18: #{tpu_custom_call.1} parent=15 // pred_check_branch
          %257 = sbr.rel (%p255) target = $region20
        $region19: #{tpu_custom_call.1} parent=15 // pred_region
          %p258 = scmp.lt.s32.totalorder %s23, 1
          %s259 = scalar_select %p258, %s23, 1
          %s260 = smul.addr %s259, 8
          %s261 = scalar_lea.vmem %s0, %s260
        $region20: #{tpu_custom_call.1} parent=15 // pred_fallthru
          _
        // Predicated region
        $region21: #{tpu_custom_call.1} parent=15 // pred_check
          %p262 = pneg %p74
        $region22: #{tpu_custom_call.1} parent=15 // pred_check_branch
          %264 = sbr.rel (%p262) target = $region24
        $region23: #{tpu_custom_call.1} parent=15 // pred_region
          %p265 = scmp.lt.s32.totalorder %s24, 1
          %s266 = scalar_select %p265, %s24, 1
          %s267 = smul.addr %s266, 12
          %s268 = smul.addr %s267, 4
          %s269 = scalar_lea.vmem %s1, %s268
        $region24: #{tpu_custom_call.1} parent=15 // pred_fallthru
          _
        // Predicated region
        $region25: #{tpu_custom_call.1} parent=15 // pred_check
          %p270 = pneg %p100
        $region26: #{tpu_custom_call.1} parent=15 // pred_check_branch
          %272 = sbr.rel (%p270) target = $region28
        $region27: #{tpu_custom_call.1} parent=15 // pred_region
          %p273 = scmp.lt.s32.totalorder %s24, 1
          %s274 = scalar_select %p273, %s24, 1
          %s275 = smul.addr %s274, 4
          %s276 = smul.addr %s275, 4
          %s277 = scalar_lea.vmem %s2, %s276
        $region28: #{tpu_custom_call.1} parent=15 // pred_fallthru
          _
        // Predicated region
        $region29: #{tpu_custom_call.1} parent=15 // pred_check
          %p278 = pneg %p126
        $region30: #{tpu_custom_call.1} parent=15 // pred_check_branch
          %280 = sbr.rel (%p278) target = $region32
        $region31: #{tpu_custom_call.1} parent=15 // pred_region
          %p281 = scmp.lt.s32.totalorder %s24, 1
          %s282 = scalar_select %p281, %s24, 1
          %s283 = smul.addr %s282, 4
          %s284 = smul.addr %s283, 4
          %s285 = scalar_lea.vmem %s3, %s284
        $region32: #{tpu_custom_call.1} parent=15 // pred_fallthru
          _
        // Predicated region
        $region33: #{tpu_custom_call.1} parent=15 // pred_check
          %p286 = pneg %p152
        $region34: #{tpu_custom_call.1} parent=15 // pred_check_branch
          %288 = sbr.rel (%p286) target = $region36
        $region35: #{tpu_custom_call.1} parent=15 // pred_region
          %p289 = scmp.lt.s32.totalorder %s24, 1
          %s290 = scalar_select %p289, %s24, 1
          %s291 = scalar_lea.vmem %s4, %s290
        $region36: #{tpu_custom_call.1} parent=15 // pred_fallthru
          _
        // Predicated region
        $region37: #{tpu_custom_call.1} parent=15 // pred_check
          %p292 = pneg %p178
        $region38: #{tpu_custom_call.1} parent=15 // pred_check_branch
          %294 = sbr.rel (%p292) target = $region40
        $region39: #{tpu_custom_call.1} parent=15 // pred_region
          %p295 = scmp.lt.s32.totalorder %s24, 1
          %s296 = scalar_select %p295, %s24, 1
          %s297 = smul.addr %s296, 16
          %s298 = smul.addr %s297, 4
          %s299 = scalar_lea.vmem %s5, %s298
        $region40: #{tpu_custom_call.1} parent=15 // pred_fallthru
          _
        // Predicated region
        $region41: #{tpu_custom_call.1} parent=15 // pred_check
          %p300 = pneg %p204
        $region42: #{tpu_custom_call.1} parent=15 // pred_check_branch
          %302 = sbr.rel (%p300) target = $region44
        $region43: #{tpu_custom_call.1} parent=15 // pred_region
          %p303 = scmp.lt.s32.totalorder %s24, 1
          %s304 = scalar_select %p303, %s24, 1
          %s305 = smul.addr %s304, 2
          %s306 = smul.addr %s305, 8
          %s307 = scalar_lea.vmem %s6, %s306
        $region44: #{tpu_custom_call.1} parent=15 // pred_fallthru
          _
      $region16: #{tpu_custom_call.1} parent=5 // pred_fallthru
        _
      %p308 = scmp.le.s32.totalorder 1, %s16
      %p309 = scmp.lt.s32.totalorder %s16, 5
      %p310 = pnand %p308, %p309
      %p311 = pneg %p310
      // Predicated region
      $region45: #{tpu_custom_call.1} parent=5 // pred_check
        _
      $region46: #{tpu_custom_call.1} parent=5 // pred_check_branch
        %313 = sbr.rel (%p310) target = $region48
      $region47: #{tpu_custom_call.1} parent=5 // pred_region
        %s314 = ssub.s32 %s16, 1
        %p315 = scmp.lt.s32.totalorder %s25, 1
        %s316 = scalar_select %p315, %s25, 1
        %s317 = smul.addr %s316, 8
        %s318 = scalar_lea.vmem %s0, %s317
        %p319 = pneg %p54
        %p320 = pneg %p51
        %p321 = scmp.lt.s32.totalorder %s26, 1
        %s322 = scalar_select %p321, %s26, 1
        %s323 = smul.addr %s322, 12
        %s324 = smul.addr %s323, 4
        %s325 = scalar_lea.vmem %s1, %s324
        %p326 = pneg %p80
        %p327 = pneg %p77
        %p328 = scmp.lt.s32.totalorder %s26, 1
        %s329 = scalar_select %p328, %s26, 1
        %s330 = smul.addr %s329, 4
        %s331 = smul.addr %s330, 4
        %s332 = scalar_lea.vmem %s2, %s331
        %p333 = pneg %p106
        %p334 = pneg %p103
        %p335 = scmp.lt.s32.totalorder %s26, 1
        %s336 = scalar_select %p335, %s26, 1
        %s337 = smul.addr %s336, 4
        %s338 = smul.addr %s337, 4
        %s339 = scalar_lea.vmem %s3, %s338
        %p340 = pneg %p132
        %p341 = pneg %p129
        %p342 = scmp.lt.s32.totalorder %s26, 1
        %s343 = scalar_select %p342, %s26, 1
        %s344 = scalar_lea.vmem %s4, %s343
        %p345 = pneg %p158
        %p346 = pneg %p155
        %p347 = scmp.lt.s32.totalorder %s26, 1
        %s348 = scalar_select %p347, %s26, 1
        %s349 = smul.addr %s348, 16
        %s350 = smul.addr %s349, 4
        %s351 = scalar_lea.vmem %s5, %s350
        %p352 = pneg %p184
        %p353 = pneg %p181
        %p354 = scmp.lt.s32.totalorder %s26, 1
        %s355 = scalar_select %p354, %s26, 1
        %s356 = smul.addr %s355, 2
        %s357 = smul.addr %s356, 8
        %s358 = scalar_lea.vmem %s6, %s357
        %p359 = pneg %p210
        %p360 = pneg %p207
        %p361 = pneg %p236
        %p362 = pneg %p233
        %s363 = sand.u32 %s223, 1
        %s364 = scalar_lea.sflag [#allocation4], %s363
        %s365 = sand.u32 %s223, 1
        %s366 = smul.addr %s365, 8
        %s367 = scalar_lea.vmem [#allocation3], %s366
        %p368 = scmp.lt.s32.totalorder %s25, 1
        %s369 = scalar_select %p368, %s25, 1
        %s370 = smul.addr %s369, 8
        %s371 = scalar_lea.vmem %s0, %s370
        %p372 = scmp.lt.s32.totalorder %s26, 1
        %s373 = scalar_select %p372, %s26, 1
        %s374 = smul.addr %s373, 12
        %s375 = smul.addr %s374, 4
        %s376 = scalar_lea.vmem %s1, %s375
        %p377 = scmp.lt.s32.totalorder %s26, 1
        %s378 = scalar_select %p377, %s26, 1
        %s379 = smul.addr %s378, 4
        %s380 = smul.addr %s379, 4
        %s381 = scalar_lea.vmem %s2, %s380
        %p382 = scmp.lt.s32.totalorder %s26, 1
        %s383 = scalar_select %p382, %s26, 1
        %s384 = smul.addr %s383, 4
        %s385 = smul.addr %s384, 4
        %s386 = scalar_lea.vmem %s3, %s385
        %p387 = scmp.lt.s32.totalorder %s26, 1
        %s388 = scalar_select %p387, %s26, 1
        %s389 = scalar_lea.vmem %s4, %s388
        %p390 = scmp.lt.s32.totalorder %s26, 1
        %s391 = scalar_select %p390, %s26, 1
        %s392 = smul.addr %s391, 16
        %s393 = smul.addr %s392, 4
        %s394 = scalar_lea.vmem %s5, %s393
        %p395 = scmp.lt.s32.totalorder %s26, 1
        %s396 = scalar_select %p395, %s26, 1
        %s397 = smul.addr %s396, 2
        %s398 = smul.addr %s397, 8
        %s399 = scalar_lea.vmem %s6, %s398
        %p401 = scmp.eq.s32.totalorder %s26, 0
        // Predicated region
        $region49: #{tpu_custom_call.1} parent=47 // pred_check
          %p402 = pneg %p401
        $region50: #{tpu_custom_call.1} parent=47 // pred_check_branch
          %404 = sbr.rel (%p402) target = $region52
        $region51: #{tpu_custom_call.1} parent=47 // pred_region
          %v405 = vld [vmem:[%s371] sm:$0xff]
          %vm406 = vcmask 261120
          %407 = vst.msk [vmem:[#allocation2] sm:$0xff] %vm406, %v405
        $region52: #{tpu_custom_call.1} parent=47 // pred_fallthru
          _
        %v408 = vld [vmem:[#allocation2] sm:$0xff]
        %v409 = vpack.c.bf16 %v408, %v408
        %v410 = vld [vmem:[%s399] sm:$0xff]
        %v411 = vld [vmem:[%s399 + $0x8] sm:$0x1]
        %v412 = vld [vmem:[%s376] sm:$0xf]
        %v413 = vld [vmem:[%s376 + $0x4] sm:$0xf]
        %v414 = vld [vmem:[%s376 + $0x8] sm:$0xf]
        %v415 = vld [vmem:[%s376 + $0xc] sm:$0xf]
        %v416 = vlaneseq
        %v417 = vshrl.u32 %v416, 7
        %v418 = vsub.s32 0, %v417
        %v419 = vrot.slane %v410, %v418
        %v424 = vunpack.c.l.b16 %v412
        %v425 = vunpack.c.l.b16 %v413
        %v426 = vunpack.c.l.b16 %v414
        %v427 = vunpack.c.l.b16 %v415
        %v428 = vpack.c.b16 %v425, %v424
        %v429 = vpack.c.b16 %v427, %v426
        %vm432 = vcmask 261120
        %v434 = vsel %vm432, %v409, 0
        %436 = vmatprep.subr.bf16.mxu0 0
        %437 = vmatpush1.bf16.msra.mxu0 0
        %438 = vmatprep.subr.bf16.mxu0 0
        %439 = vmatpush1.bf16.msra.mxu0 0
        %440 = vmatprep.subr.bf16.mxu0 0
        %441 = vmatpush1.bf16.msra.mxu0 0
        %442 = vmatprep.subr.bf16.mxu0 0
        %443 = vmatpush1.bf16.msra.mxu0 0
        %444 = vmatprep.subr.bf16.mxu0 0
        %445 = vmatpush1.bf16.msra.mxu0 0
        %446 = vmatprep.subr.bf16.mxu0 0
        %447 = vmatpush1.bf16.msra.mxu0 0
        %448 = vmatprep.subr.bf16.mxu0 0
        %449 = vmatpush1.bf16.msra.mxu0 %v429
        %450 = vmatprep.subr.bf16.mxu0 0
        %451 = vmatpush1.bf16.msra.mxu0 %v428
        %452 = vmatprep.subr.bf16.mxu0 0
        %453 = vmatpush2.bf16.msra.mxu0 0
        %454 = vmatprep.subr.bf16.mxu0 0
        %455 = vmatpush2.bf16.msra.mxu0 0
        %456 = vmatprep.subr.bf16.mxu0 0
        %457 = vmatpush2.bf16.msra.mxu0 0
        %458 = vmatprep.subr.bf16.mxu0 0
        %459 = vmatpush2.bf16.msra.mxu0 0
        %460 = vmatprep.subr.bf16.mxu0 0
        %461 = vmatpush2.bf16.msra.mxu0 0
        %462 = vmatprep.subr.bf16.mxu0 0
        %463 = vmatpush2.bf16.msra.mxu0 0
        %464 = vmatprep.subr.bf16.mxu0 0
        %465 = vmatpush2.bf16.msra.mxu0 0
        %466 = vmatprep.subr.bf16.mxu0 0
        %467 = vmatpush2.bf16.msra.mxu0 0
        %468 = vmatprep.mubr.bf16.mxu0 0
        %469 = vmatmul.mubr.bf16.gmra.mxu0 %v434
        %v470 = vpop.f32.mrf.mxu0
        %v471 = vadd.f32 %v419, %v470
        %v472 = vpop.f32.mrf.mxu0
        %v473 = vpop.f32.mrf.mxu0
        %v474 = vpop.f32.mrf.mxu0
        %475 = vdwg.mxu0
        %s476 = scalar_lea.vmem %s376, 16
        %v477 = vld [vmem:[%s476] sm:$0xf]
        %v478 = vld [vmem:[%s476 + $0x4] sm:$0xf]
        %v479 = vld [vmem:[%s476 + $0x8] sm:$0xf]
        %v480 = vld [vmem:[%s476 + $0xc] sm:$0xf]
        %v481 = vlaneseq
        %v482 = vshrl.u32 %v481, 7
        %v483 = vsub.s32 1, %v482
        %v484 = vrot.slane %v410, %v483
        %v489 = vunpack.c.l.b16 %v477
        %v490 = vunpack.c.l.b16 %v478
        %v491 = vunpack.c.l.b16 %v479
        %v492 = vunpack.c.l.b16 %v480
        %v493 = vpack.c.b16 %v490, %v489
        %v494 = vpack.c.b16 %v492, %v491
        %497 = vmatprep.subr.bf16.mxu0 0
        %498 = vmatpush1.bf16.msra.mxu0 0
        %499 = vmatprep.subr.bf16.mxu0 0
        %500 = vmatpush1.bf16.msra.mxu0 0
        %501 = vmatprep.subr.bf16.mxu0 0
        %502 = vmatpush1.bf16.msra.mxu0 0
        %503 = vmatprep.subr.bf16.mxu0 0
        %504 = vmatpush1.bf16.msra.mxu0 0
        %505 = vmatprep.subr.bf16.mxu0 0
        %506 = vmatpush1.bf16.msra.mxu0 0
        %507 = vmatprep.subr.bf16.mxu0 0
        %508 = vmatpush1.bf16.msra.mxu0 0
        %509 = vmatprep.subr.bf16.mxu0 0
        %510 = vmatpush1.bf16.msra.mxu0 %v494
        %511 = vmatprep.subr.bf16.mxu0 0
        %512 = vmatpush1.bf16.msra.mxu0 %v493
        %513 = vmatprep.subr.bf16.mxu0 0
        %514 = vmatpush2.bf16.msra.mxu0 0
        %515 = vmatprep.subr.bf16.mxu0 0
        %516 = vmatpush2.bf16.msra.mxu0 0
        %517 = vmatprep.subr.bf16.mxu0 0
        %518 = vmatpush2.bf16.msra.mxu0 0
        %519 = vmatprep.subr.bf16.mxu0 0
        %520 = vmatpush2.bf16.msra.mxu0 0
        %521 = vmatprep.subr.bf16.mxu0 0
        %522 = vmatpush2.bf16.msra.mxu0 0
        %523 = vmatprep.subr.bf16.mxu0 0
        %524 = vmatpush2.bf16.msra.mxu0 0
        %525 = vmatprep.subr.bf16.mxu0 0
        %526 = vmatpush2.bf16.msra.mxu0 0
        %527 = vmatprep.subr.bf16.mxu0 0
        %528 = vmatpush2.bf16.msra.mxu0 0
        %529 = vmatprep.mubr.bf16.mxu0 0
        %530 = vmatmul.mubr.bf16.gmra.mxu0 %v434
        %v531 = vpop.f32.mrf.mxu0
        %v532 = vadd.f32 %v484, %v531
        %v533 = vpop.f32.mrf.mxu0
        %v534 = vpop.f32.mrf.mxu0
        %v535 = vpop.f32.mrf.mxu0
        %536 = vdwg.mxu0
        %s537 = scalar_lea.vmem %s376, 32
        %v538 = vld [vmem:[%s537] sm:$0xf]
        %v539 = vld [vmem:[%s537 + $0x4] sm:$0xf]
        %v540 = vld [vmem:[%s537 + $0x8] sm:$0xf]
        %v541 = vld [vmem:[%s537 + $0xc] sm:$0xf]
        %v542 = vlaneseq
        %v543 = vshrl.u32 %v542, 7
        %v544 = vsub.s32 2, %v543
        %v545 = vrot.slane %v410, %v544
        %v550 = vunpack.c.l.b16 %v538
        %v551 = vunpack.c.l.b16 %v539
        %v552 = vunpack.c.l.b16 %v540
        %v553 = vunpack.c.l.b16 %v541
        %v554 = vpack.c.b16 %v551, %v550
        %v555 = vpack.c.b16 %v553, %v552
        %558 = vmatprep.subr.bf16.mxu0 0
        %559 = vmatpush1.bf16.msra.mxu0 0
        %560 = vmatprep.subr.bf16.mxu0 0
        %561 = vmatpush1.bf16.msra.mxu0 0
        %562 = vmatprep.subr.bf16.mxu0 0
        %563 = vmatpush1.bf16.msra.mxu0 0
        %564 = vmatprep.subr.bf16.mxu0 0
        %565 = vmatpush1.bf16.msra.mxu0 0
        %566 = vmatprep.subr.bf16.mxu0 0
        %567 = vmatpush1.bf16.msra.mxu0 0
        %568 = vmatprep.subr.bf16.mxu0 0
        %569 = vmatpush1.bf16.msra.mxu0 0
        %570 = vmatprep.subr.bf16.mxu0 0
        %571 = vmatpush1.bf16.msra.mxu0 %v555
        %572 = vmatprep.subr.bf16.mxu0 0
        %573 = vmatpush1.bf16.msra.mxu0 %v554
        %574 = vmatprep.subr.bf16.mxu0 0
        %575 = vmatpush2.bf16.msra.mxu0 0
        %576 = vmatprep.subr.bf16.mxu0 0
        %577 = vmatpush2.bf16.msra.mxu0 0
        %578 = vmatprep.subr.bf16.mxu0 0
        %579 = vmatpush2.bf16.msra.mxu0 0
        %580 = vmatprep.subr.bf16.mxu0 0
        %581 = vmatpush2.bf16.msra.mxu0 0
        %582 = vmatprep.subr.bf16.mxu0 0
        %583 = vmatpush2.bf16.msra.mxu0 0
        %584 = vmatprep.subr.bf16.mxu0 0
        %585 = vmatpush2.bf16.msra.mxu0 0
        %586 = vmatprep.subr.bf16.mxu0 0
        %587 = vmatpush2.bf16.msra.mxu0 0
        %588 = vmatprep.subr.bf16.mxu0 0
        %589 = vmatpush2.bf16.msra.mxu0 0
        %590 = vmatprep.mubr.bf16.mxu0 0
        %591 = vmatmul.mubr.bf16.gmra.mxu0 %v434
        %v592 = vpop.f32.mrf.mxu0
        %v593 = vadd.f32 %v545, %v592
        %v594 = vpop.f32.mrf.mxu0
        %v595 = vpop.f32.mrf.mxu0
        %v596 = vpop.f32.mrf.mxu0
        %597 = vdwg.mxu0
        %v598 = vpack.c.bf16 %v471, %v471
        %v599 = vpack.c.bf16 %v532, %v532
        %v600 = vpack.c.bf16 %v593, %v593
        %vm601 = vcmask 64512
        %v603 = vsel %vm601, %v598, 0
        %v606 = vsel %vm601, %v599, 0
        %608 = vmatprep.subr.bf16.mxu0 0
        %609 = vmatpush1.bf16.xpose.msra.mxu0 0
        %610 = vmatprep.subr.bf16.mxu0 0
        %611 = vmatpush1.bf16.xpose.msra.mxu0 0
        %612 = vmatprep.subr.bf16.mxu0 0
        %613 = vmatpush1.bf16.xpose.msra.mxu0 0
        %614 = vmatprep.subr.bf16.mxu0 0
        %615 = vmatpush1.bf16.xpose.msra.mxu0 0
        %616 = vmatprep.subr.bf16.mxu0 0
        %617 = vmatpush1.bf16.xpose.msra.mxu0 0
        %618 = vmatprep.subr.bf16.mxu0 0
        %619 = vmatpush1.bf16.xpose.msra.mxu0 0
        %620 = vmatprep.subr.bf16.mxu0 0
        %621 = vmatpush1.bf16.xpose.msra.mxu0 0
        %622 = vmatprep.subr.bf16.mxu0 0
        %623 = vmatpush1.bf16.xpose.msra.mxu0 %v606
        %624 = vmatprep.subr.bf16.mxu0 0
        %625 = vmatpush2.bf16.xpose.msra.mxu0 0
        %626 = vmatprep.subr.bf16.mxu0 0
        %627 = vmatpush2.bf16.xpose.msra.mxu0 0
        %628 = vmatprep.subr.bf16.mxu0 0
        %629 = vmatpush2.bf16.xpose.msra.mxu0 0
        %630 = vmatprep.subr.bf16.mxu0 0
        %631 = vmatpush2.bf16.xpose.msra.mxu0 0
        %632 = vmatprep.subr.bf16.mxu0 0
        %633 = vmatpush2.bf16.xpose.msra.mxu0 0
        %634 = vmatprep.subr.bf16.mxu0 0
        %635 = vmatpush2.bf16.xpose.msra.mxu0 0
        %636 = vmatprep.subr.bf16.mxu0 0
        %637 = vmatpush2.bf16.xpose.msra.mxu0 0
        %638 = vmatprep.subr.bf16.mxu0 0
        %639 = vmatpush2.bf16.xpose.msra.mxu0 0
        %640 = vmatprep.mubr.bf16.mxu0 0
        %641 = vmatmul.mubr.bf16.gmra.mxu0 %v603
        %v642 = vpop.f32.mrf.mxu0
        %v643 = vadd.f32 0.0, %v642
        %v644 = vpop.f32.mrf.mxu0
        %v645 = vpop.f32.mrf.mxu0
        %v646 = vpop.f32.mrf.mxu0
        %647 = vdwg.mxu0
        %v648 = vsel %vm601, %v643, -inf
        %649 = vmax.xlane.f32.xlu0 %v648
        %v650 = vpop.xlane.xlu0 %649
        %v651 = vsub.f32 %v643, %v650
        %v652 = vmul.f32 %v651, 1.442695
        %v653 = vpow.pop %v652
        %v654 = vsel %vm601, %v653, 0.0
        %655 = vadd.xlane.f32.xlu0 %v654
        %v656 = vpop.xlane.xlu0 %655
        %v657 = vrcp.pop %v656
        %v658 = vmul.f32 %v653, %v657
        %v659 = vpack.c.bf16 %v658, %v658
        %v661 = vsel %vm601, %v659, 0
        %vm663 = vcmask 1043456
        %v665 = vsel %vm663, %v600, 0
        %667 = vmatprep.subr.bf16.mxu0 0
        %668 = vmatpush1.bf16.msra.mxu0 0
        %669 = vmatprep.subr.bf16.mxu0 0
        %670 = vmatpush1.bf16.msra.mxu0 0
        %671 = vmatprep.subr.bf16.mxu0 0
        %672 = vmatpush1.bf16.msra.mxu0 0
        %673 = vmatprep.subr.bf16.mxu0 0
        %674 = vmatpush1.bf16.msra.mxu0 0
        %675 = vmatprep.subr.bf16.mxu0 0
        %676 = vmatpush1.bf16.msra.mxu0 0
        %677 = vmatprep.subr.bf16.mxu0 0
        %678 = vmatpush1.bf16.msra.mxu0 0
        %679 = vmatprep.subr.bf16.mxu0 0
        %680 = vmatpush1.bf16.msra.mxu0 0
        %681 = vmatprep.subr.bf16.mxu0 0
        %682 = vmatpush1.bf16.msra.mxu0 %v665
        %683 = vmatprep.subr.bf16.mxu0 0
        %684 = vmatpush2.bf16.msra.mxu0 0
        %685 = vmatprep.subr.bf16.mxu0 0
        %686 = vmatpush2.bf16.msra.mxu0 0
        %687 = vmatprep.subr.bf16.mxu0 0
        %688 = vmatpush2.bf16.msra.mxu0 0
        %689 = vmatprep.subr.bf16.mxu0 0
        %690 = vmatpush2.bf16.msra.mxu0 0
        %691 = vmatprep.subr.bf16.mxu0 0
        %692 = vmatpush2.bf16.msra.mxu0 0
        %693 = vmatprep.subr.bf16.mxu0 0
        %694 = vmatpush2.bf16.msra.mxu0 0
        %695 = vmatprep.subr.bf16.mxu0 0
        %696 = vmatpush2.bf16.msra.mxu0 0
        %697 = vmatprep.subr.bf16.mxu0 0
        %698 = vmatpush2.bf16.msra.mxu0 0
        %699 = vmatprep.mubr.bf16.mxu0 0
        %700 = vmatmul.mubr.bf16.gmra.mxu0 %v661
        %v701 = vpop.f32.mrf.mxu0
        %v702 = vadd.f32 0.0, %v701
        %v703 = vpop.f32.mrf.mxu0
        %v704 = vpop.f32.mrf.mxu0
        %v705 = vpop.f32.mrf.mxu0
        %706 = vdwg.mxu0
        %v707 = vpack.c.bf16 %v702, %v702
        %v708 = vld [vmem:[%s381] sm:$0xf]
        %710 = vrot.lane.b32.xlu0 %v598, 120
        %v711 = vpop.permute.xlu0 %710
        %713 = vrot.lane.b32.xlu0 %v599, 120
        %v714 = vpop.permute.xlu0 %713
        %v716 = vsel %vm601, %v711, 0
        %v719 = vsel %vm601, %v714, 0
        %721 = vmatprep.subr.bf16.mxu0 0
        %722 = vmatpush1.bf16.xpose.msra.mxu0 0
        %723 = vmatprep.subr.bf16.mxu0 0
        %724 = vmatpush1.bf16.xpose.msra.mxu0 0
        %725 = vmatprep.subr.bf16.mxu0 0
        %726 = vmatpush1.bf16.xpose.msra.mxu0 0
        %727 = vmatprep.subr.bf16.mxu0 0
        %728 = vmatpush1.bf16.xpose.msra.mxu0 0
        %729 = vmatprep.subr.bf16.mxu0 0
        %730 = vmatpush1.bf16.xpose.msra.mxu0 0
        %731 = vmatprep.subr.bf16.mxu0 0
        %732 = vmatpush1.bf16.xpose.msra.mxu0 0
        %733 = vmatprep.subr.bf16.mxu0 0
        %734 = vmatpush1.bf16.xpose.msra.mxu0 0
        %735 = vmatprep.subr.bf16.mxu0 0
        %736 = vmatpush1.bf16.xpose.msra.mxu0 %v719
        %737 = vmatprep.subr.bf16.mxu0 0
        %738 = vmatpush2.bf16.xpose.msra.mxu0 0
        %739 = vmatprep.subr.bf16.mxu0 0
        %740 = vmatpush2.bf16.xpose.msra.mxu0 0
        %741 = vmatprep.subr.bf16.mxu0 0
        %742 = vmatpush2.bf16.xpose.msra.mxu0 0
        %743 = vmatprep.subr.bf16.mxu0 0
        %744 = vmatpush2.bf16.xpose.msra.mxu0 0
        %745 = vmatprep.subr.bf16.mxu0 0
        %746 = vmatpush2.bf16.xpose.msra.mxu0 0
        %747 = vmatprep.subr.bf16.mxu0 0
        %748 = vmatpush2.bf16.xpose.msra.mxu0 0
        %749 = vmatprep.subr.bf16.mxu0 0
        %750 = vmatpush2.bf16.xpose.msra.mxu0 0
        %751 = vmatprep.subr.bf16.mxu0 0
        %752 = vmatpush2.bf16.xpose.msra.mxu0 0
        %753 = vmatprep.mubr.bf16.mxu0 0
        %754 = vmatmul.mubr.bf16.gmra.mxu0 %v716
        %v755 = vpop.f32.mrf.mxu0
        %v756 = vadd.f32 0.0, %v755
        %v757 = vpop.f32.mrf.mxu0
        %v758 = vpop.f32.mrf.mxu0
        %v759 = vpop.f32.mrf.mxu0
        %760 = vdwg.mxu0
        %v761 = vsel %vm601, %v756, -inf
        %762 = vmax.xlane.f32.xlu0 %v761
        %v763 = vpop.xlane.xlu0 %762
        %v764 = vsub.f32 %v756, %v763
        %v765 = vmul.f32 %v764, 1.442695
        %v766 = vpow.pop %v765
        %v767 = vsel %vm601, %v766, 0.0
        %768 = vadd.xlane.f32.xlu0 %v767
        %v769 = vpop.xlane.xlu0 %768
        %v770 = vrcp.pop %v769
        %v771 = vmul.f32 %v766, %v770
        %v772 = vpack.c.bf16 %v771, %v771
        %774 = vrot.lane.b32.xlu0 %v600, 120
        %v775 = vpop.permute.xlu0 %774
        %v777 = vsel %vm601, %v772, 0
        %v780 = vsel %vm663, %v775, 0
        %782 = vmatprep.subr.bf16.mxu0 0
        %783 = vmatpush1.bf16.msra.mxu0 0
        %784 = vmatprep.subr.bf16.mxu0 0
        %785 = vmatpush1.bf16.msra.mxu0 0
        %786 = vmatprep.subr.bf16.mxu0 0
        %787 = vmatpush1.bf16.msra.mxu0 0
        %788 = vmatprep.subr.bf16.mxu0 0
        %789 = vmatpush1.bf16.msra.mxu0 0
        %790 = vmatprep.subr.bf16.mxu0 0
        %791 = vmatpush1.bf16.msra.mxu0 0
        %792 = vmatprep.subr.bf16.mxu0 0
        %793 = vmatpush1.bf16.msra.mxu0 0
        %794 = vmatprep.subr.bf16.mxu0 0
        %795 = vmatpush1.bf16.msra.mxu0 0
        %796 = vmatprep.subr.bf16.mxu0 0
        %797 = vmatpush1.bf16.msra.mxu0 %v780
        %798 = vmatprep.subr.bf16.mxu0 0
        %799 = vmatpush2.bf16.msra.mxu0 0
        %800 = vmatprep.subr.bf16.mxu0 0
        %801 = vmatpush2.bf16.msra.mxu0 0
        %802 = vmatprep.subr.bf16.mxu0 0
        %803 = vmatpush2.bf16.msra.mxu0 0
        %804 = vmatprep.subr.bf16.mxu0 0
        %805 = vmatpush2.bf16.msra.mxu0 0
        %806 = vmatprep.subr.bf16.mxu0 0
        %807 = vmatpush2.bf16.msra.mxu0 0
        %808 = vmatprep.subr.bf16.mxu0 0
        %809 = vmatpush2.bf16.msra.mxu0 0
        %810 = vmatprep.subr.bf16.mxu0 0
        %811 = vmatpush2.bf16.msra.mxu0 0
        %812 = vmatprep.subr.bf16.mxu0 0
        %813 = vmatpush2.bf16.msra.mxu0 0
        %814 = vmatprep.mubr.bf16.mxu0 0
        %815 = vmatmul.mubr.bf16.gmra.mxu0 %v777
        %v816 = vpop.f32.mrf.mxu0
        %v817 = vadd.f32 0.0, %v816
        %v818 = vpop.f32.mrf.mxu0
        %v819 = vpop.f32.mrf.mxu0
        %v820 = vpop.f32.mrf.mxu0
        %821 = vdwg.mxu0
        %v822 = vpack.c.bf16 %v817, %v817
        %s823 = scalar_lea.vmem %s381, 4
        %v824 = vld [vmem:[%s823] sm:$0xf]
        %v826 = vsel %vm601, %v822, 0
        %v829 = vsel %vm663, %v824, 0
        %831 = vmatprep.subr.bf16.mxu0 0
        %832 = vmatpush1.bf16.msra.mxu0 0
        %833 = vmatprep.subr.bf16.mxu0 0
        %834 = vmatpush1.bf16.msra.mxu0 0
        %835 = vmatprep.subr.bf16.mxu0 0
        %836 = vmatpush1.bf16.msra.mxu0 0
        %837 = vmatprep.subr.bf16.mxu0 0
        %838 = vmatpush1.bf16.msra.mxu0 0
        %839 = vmatprep.subr.bf16.mxu0 0
        %840 = vmatpush1.bf16.msra.mxu0 0
        %841 = vmatprep.subr.bf16.mxu0 0
        %842 = vmatpush1.bf16.msra.mxu0 0
        %843 = vmatprep.subr.bf16.mxu0 0
        %844 = vmatpush1.bf16.msra.mxu0 0
        %845 = vmatprep.subr.bf16.mxu0 0
        %846 = vmatpush1.bf16.msra.mxu0 %v829
        %847 = vmatprep.subr.bf16.mxu0 0
        %848 = vmatpush2.bf16.msra.mxu0 0
        %849 = vmatprep.subr.bf16.mxu0 0
        %850 = vmatpush2.bf16.msra.mxu0 0
        %851 = vmatprep.subr.bf16.mxu0 0
        %852 = vmatpush2.bf16.msra.mxu0 0
        %853 = vmatprep.subr.bf16.mxu0 0
        %854 = vmatpush2.bf16.msra.mxu0 0
        %855 = vmatprep.subr.bf16.mxu0 0
        %856 = vmatpush2.bf16.msra.mxu0 0
        %857 = vmatprep.subr.bf16.mxu0 0
        %858 = vmatpush2.bf16.msra.mxu0 0
        %859 = vmatprep.subr.bf16.mxu0 0
        %860 = vmatpush2.bf16.msra.mxu0 0
        %861 = vmatprep.subr.bf16.mxu0 0
        %862 = vmatpush2.bf16.msra.mxu0 0
        %863 = vmatprep.mubr.bf16.mxu0 0
        %864 = vmatmul.mubr.bf16.gmra.mxu0 %v826
        %v865 = vpop.f32.mrf.mxu0
        %v866 = vadd.f32 0.0, %v865
        %v867 = vpop.f32.mrf.mxu0
        %v868 = vpop.f32.mrf.mxu0
        %v869 = vpop.f32.mrf.mxu0
        %870 = vdwg.mxu0
        %v872 = vsel %vm601, %v707, 0
        %v875 = vsel %vm663, %v708, 0
        %877 = vmatprep.subr.bf16.mxu0 0
        %878 = vmatpush1.bf16.msra.mxu0 0
        %879 = vmatprep.subr.bf16.mxu0 0
        %880 = vmatpush1.bf16.msra.mxu0 0
        %881 = vmatprep.subr.bf16.mxu0 0
        %882 = vmatpush1.bf16.msra.mxu0 0
        %883 = vmatprep.subr.bf16.mxu0 0
        %884 = vmatpush1.bf16.msra.mxu0 0
        %885 = vmatprep.subr.bf16.mxu0 0
        %886 = vmatpush1.bf16.msra.mxu0 0
        %887 = vmatprep.subr.bf16.mxu0 0
        %888 = vmatpush1.bf16.msra.mxu0 0
        %889 = vmatprep.subr.bf16.mxu0 0
        %890 = vmatpush1.bf16.msra.mxu0 0
        %891 = vmatprep.subr.bf16.mxu0 0
        %892 = vmatpush1.bf16.msra.mxu0 %v875
        %893 = vmatprep.subr.bf16.mxu0 0
        %894 = vmatpush2.bf16.msra.mxu0 0
        %895 = vmatprep.subr.bf16.mxu0 0
        %896 = vmatpush2.bf16.msra.mxu0 0
        %897 = vmatprep.subr.bf16.mxu0 0
        %898 = vmatpush2.bf16.msra.mxu0 0
        %899 = vmatprep.subr.bf16.mxu0 0
        %900 = vmatpush2.bf16.msra.mxu0 0
        %901 = vmatprep.subr.bf16.mxu0 0
        %902 = vmatpush2.bf16.msra.mxu0 0
        %903 = vmatprep.subr.bf16.mxu0 0
        %904 = vmatpush2.bf16.msra.mxu0 0
        %905 = vmatprep.subr.bf16.mxu0 0
        %906 = vmatpush2.bf16.msra.mxu0 0
        %907 = vmatprep.subr.bf16.mxu0 0
        %908 = vmatpush2.bf16.msra.mxu0 0
        %909 = vmatprep.mubr.bf16.mxu0 0
        %910 = vmatmul.mubr.bf16.gmra.mxu0 %v872
        %v911 = vpop.f32.mrf.mxu0
        %v912 = vadd.f32 %v866, %v911
        %v913 = vpop.f32.mrf.mxu0
        %v914 = vpop.f32.mrf.mxu0
        %v915 = vpop.f32.mrf.mxu0
        %916 = vdwg.mxu0
        %917 = vrot.lane.b32.xlu0 %v598, 112
        %v918 = vpop.permute.xlu0 %917
        %919 = vrot.lane.b32.xlu0 %v599, 112
        %v920 = vpop.permute.xlu0 %919
        %v922 = vsel %vm601, %v918, 0
        %v925 = vsel %vm601, %v920, 0
        %927 = vmatprep.subr.bf16.mxu0 0
        %928 = vmatpush1.bf16.xpose.msra.mxu0 0
        %929 = vmatprep.subr.bf16.mxu0 0
        %930 = vmatpush1.bf16.xpose.msra.mxu0 0
        %931 = vmatprep.subr.bf16.mxu0 0
        %932 = vmatpush1.bf16.xpose.msra.mxu0 0
        %933 = vmatprep.subr.bf16.mxu0 0
        %934 = vmatpush1.bf16.xpose.msra.mxu0 0
        %935 = vmatprep.subr.bf16.mxu0 0
        %936 = vmatpush1.bf16.xpose.msra.mxu0 0
        %937 = vmatprep.subr.bf16.mxu0 0
        %938 = vmatpush1.bf16.xpose.msra.mxu0 0
        %939 = vmatprep.subr.bf16.mxu0 0
        %940 = vmatpush1.bf16.xpose.msra.mxu0 0
        %941 = vmatprep.subr.bf16.mxu0 0
        %942 = vmatpush1.bf16.xpose.msra.mxu0 %v925
        %943 = vmatprep.subr.bf16.mxu0 0
        %944 = vmatpush2.bf16.xpose.msra.mxu0 0
        %945 = vmatprep.subr.bf16.mxu0 0
        %946 = vmatpush2.bf16.xpose.msra.mxu0 0
        %947 = vmatprep.subr.bf16.mxu0 0
        %948 = vmatpush2.bf16.xpose.msra.mxu0 0
        %949 = vmatprep.subr.bf16.mxu0 0
        %950 = vmatpush2.bf16.xpose.msra.mxu0 0
        %951 = vmatprep.subr.bf16.mxu0 0
        %952 = vmatpush2.bf16.xpose.msra.mxu0 0
        %953 = vmatprep.subr.bf16.mxu0 0
        %954 = vmatpush2.bf16.xpose.msra.mxu0 0
        %955 = vmatprep.subr.bf16.mxu0 0
        %956 = vmatpush2.bf16.xpose.msra.mxu0 0
        %957 = vmatprep.subr.bf16.mxu0 0
        %958 = vmatpush2.bf16.xpose.msra.mxu0 0
        %959 = vmatprep.mubr.bf16.mxu0 0
        %960 = vmatmul.mubr.bf16.gmra.mxu0 %v922
        %v961 = vpop.f32.mrf.mxu0
        %v962 = vadd.f32 0.0, %v961
        %v963 = vpop.f32.mrf.mxu0
        %v964 = vpop.f32.mrf.mxu0
        %v965 = vpop.f32.mrf.mxu0
        %966 = vdwg.mxu0
        %v967 = vsel %vm601, %v962, -inf
        %968 = vmax.xlane.f32.xlu0 %v967
        %v969 = vpop.xlane.xlu0 %968
        %v970 = vsub.f32 %v962, %v969
        %v971 = vmul.f32 %v970, 1.442695
        %v972 = vpow.pop %v971
        %v973 = vsel %vm601, %v972, 0.0
        %974 = vadd.xlane.f32.xlu0 %v973
        %v975 = vpop.xlane.xlu0 %974
        %v976 = vrcp.pop %v975
        %v977 = vmul.f32 %v972, %v976
        %v978 = vpack.c.bf16 %v977, %v977
        %979 = vrot.lane.b32.xlu0 %v600, 112
        %v980 = vpop.permute.xlu0 %979
        %v982 = vsel %vm601, %v978, 0
        %v985 = vsel %vm663, %v980, 0
        %987 = vmatprep.subr.bf16.mxu0 0
        %988 = vmatpush1.bf16.msra.mxu0 0
        %989 = vmatprep.subr.bf16.mxu0 0
        %990 = vmatpush1.bf16.msra.mxu0 0
        %991 = vmatprep.subr.bf16.mxu0 0
        %992 = vmatpush1.bf16.msra.mxu0 0
        %993 = vmatprep.subr.bf16.mxu0 0
        %994 = vmatpush1.bf16.msra.mxu0 0
        %995 = vmatprep.subr.bf16.mxu0 0
        %996 = vmatpush1.bf16.msra.mxu0 0
        %997 = vmatprep.subr.bf16.mxu0 0
        %998 = vmatpush1.bf16.msra.mxu0 0
        %999 = vmatprep.subr.bf16.mxu0 0
        %1000 = vmatpush1.bf16.msra.mxu0 0
        %1001 = vmatprep.subr.bf16.mxu0 0
        %1002 = vmatpush1.bf16.msra.mxu0 %v985
        %1003 = vmatprep.subr.bf16.mxu0 0
        %1004 = vmatpush2.bf16.msra.mxu0 0
        %1005 = vmatprep.subr.bf16.mxu0 0
        %1006 = vmatpush2.bf16.msra.mxu0 0
        %1007 = vmatprep.subr.bf16.mxu0 0
        %1008 = vmatpush2.bf16.msra.mxu0 0
        %1009 = vmatprep.subr.bf16.mxu0 0
        %1010 = vmatpush2.bf16.msra.mxu0 0
        %1011 = vmatprep.subr.bf16.mxu0 0
        %1012 = vmatpush2.bf16.msra.mxu0 0
        %1013 = vmatprep.subr.bf16.mxu0 0
        %1014 = vmatpush2.bf16.msra.mxu0 0
        %1015 = vmatprep.subr.bf16.mxu0 0
        %1016 = vmatpush2.bf16.msra.mxu0 0
        %1017 = vmatprep.subr.bf16.mxu0 0
        %1018 = vmatpush2.bf16.msra.mxu0 0
        %1019 = vmatprep.mubr.bf16.mxu0 0
        %1020 = vmatmul.mubr.bf16.gmra.mxu0 %v982
        %v1021 = vpop.f32.mrf.mxu0
        %v1022 = vadd.f32 0.0, %v1021
        %v1023 = vpop.f32.mrf.mxu0
        %v1024 = vpop.f32.mrf.mxu0
        %v1025 = vpop.f32.mrf.mxu0
        %1026 = vdwg.mxu0
        %v1027 = vpack.c.bf16 %v1022, %v1022
        %s1028 = scalar_lea.vmem %s381, 8
        %v1029 = vld [vmem:[%s1028] sm:$0xf]
        %v1031 = vsel %vm601, %v1027, 0
        %v1034 = vsel %vm663, %v1029, 0
        %1036 = vmatprep.subr.bf16.mxu0 0
        %1037 = vmatpush1.bf16.msra.mxu0 0
        %1038 = vmatprep.subr.bf16.mxu0 0
        %1039 = vmatpush1.bf16.msra.mxu0 0
        %1040 = vmatprep.subr.bf16.mxu0 0
        %1041 = vmatpush1.bf16.msra.mxu0 0
        %1042 = vmatprep.subr.bf16.mxu0 0
        %1043 = vmatpush1.bf16.msra.mxu0 0
        %1044 = vmatprep.subr.bf16.mxu0 0
        %1045 = vmatpush1.bf16.msra.mxu0 0
        %1046 = vmatprep.subr.bf16.mxu0 0
        %1047 = vmatpush1.bf16.msra.mxu0 0
        %1048 = vmatprep.subr.bf16.mxu0 0
        %1049 = vmatpush1.bf16.msra.mxu0 0
        %1050 = vmatprep.subr.bf16.mxu0 0
        %1051 = vmatpush1.bf16.msra.mxu0 %v1034
        %1052 = vmatprep.subr.bf16.mxu0 0
        %1053 = vmatpush2.bf16.msra.mxu0 0
        %1054 = vmatprep.subr.bf16.mxu0 0
        %1055 = vmatpush2.bf16.msra.mxu0 0
        %1056 = vmatprep.subr.bf16.mxu0 0
        %1057 = vmatpush2.bf16.msra.mxu0 0
        %1058 = vmatprep.subr.bf16.mxu0 0
        %1059 = vmatpush2.bf16.msra.mxu0 0
        %1060 = vmatprep.subr.bf16.mxu0 0
        %1061 = vmatpush2.bf16.msra.mxu0 0
        %1062 = vmatprep.subr.bf16.mxu0 0
        %1063 = vmatpush2.bf16.msra.mxu0 0
        %1064 = vmatprep.subr.bf16.mxu0 0
        %1065 = vmatpush2.bf16.msra.mxu0 0
        %1066 = vmatprep.subr.bf16.mxu0 0
        %1067 = vmatpush2.bf16.msra.mxu0 0
        %1068 = vmatprep.mubr.bf16.mxu0 0
        %1069 = vmatmul.mubr.bf16.gmra.mxu0 %v1031
        %v1070 = vpop.f32.mrf.mxu0
        %v1071 = vadd.f32 0.0, %v1070
        %v1072 = vpop.f32.mrf.mxu0
        %v1073 = vpop.f32.mrf.mxu0
        %v1074 = vpop.f32.mrf.mxu0
        %1075 = vdwg.mxu0
        %v1076 = vadd.f32 %v912, %v1071
        %1077 = vrot.lane.b32.xlu0 %v598, 104
        %v1078 = vpop.permute.xlu0 %1077
        %1079 = vrot.lane.b32.xlu0 %v599, 104
        %v1080 = vpop.permute.xlu0 %1079
        %v1082 = vsel %vm601, %v1078, 0
        %v1085 = vsel %vm601, %v1080, 0
        %1087 = vmatprep.subr.bf16.mxu0 0
        %1088 = vmatpush1.bf16.xpose.msra.mxu0 0
        %1089 = vmatprep.subr.bf16.mxu0 0
        %1090 = vmatpush1.bf16.xpose.msra.mxu0 0
        %1091 = vmatprep.subr.bf16.mxu0 0
        %1092 = vmatpush1.bf16.xpose.msra.mxu0 0
        %1093 = vmatprep.subr.bf16.mxu0 0
        %1094 = vmatpush1.bf16.xpose.msra.mxu0 0
        %1095 = vmatprep.subr.bf16.mxu0 0
        %1096 = vmatpush1.bf16.xpose.msra.mxu0 0
        %1097 = vmatprep.subr.bf16.mxu0 0
        %1098 = vmatpush1.bf16.xpose.msra.mxu0 0
        %1099 = vmatprep.subr.bf16.mxu0 0
        %1100 = vmatpush1.bf16.xpose.msra.mxu0 0
        %1101 = vmatprep.subr.bf16.mxu0 0
        %1102 = vmatpush1.bf16.xpose.msra.mxu0 %v1085
        %1103 = vmatprep.subr.bf16.mxu0 0
        %1104 = vmatpush2.bf16.xpose.msra.mxu0 0
        %1105 = vmatprep.subr.bf16.mxu0 0
        %1106 = vmatpush2.bf16.xpose.msra.mxu0 0
        %1107 = vmatprep.subr.bf16.mxu0 0
        %1108 = vmatpush2.bf16.xpose.msra.mxu0 0
        %1109 = vmatprep.subr.bf16.mxu0 0
        %1110 = vmatpush2.bf16.xpose.msra.mxu0 0
        %1111 = vmatprep.subr.bf16.mxu0 0
        %1112 = vmatpush2.bf16.xpose.msra.mxu0 0
        %1113 = vmatprep.subr.bf16.mxu0 0
        %1114 = vmatpush2.bf16.xpose.msra.mxu0 0
        %1115 = vmatprep.subr.bf16.mxu0 0
        %1116 = vmatpush2.bf16.xpose.msra.mxu0 0
        %1117 = vmatprep.subr.bf16.mxu0 0
        %1118 = vmatpush2.bf16.xpose.msra.mxu0 0
        %1119 = vmatprep.mubr.bf16.mxu0 0
        %1120 = vmatmul.mubr.bf16.gmra.mxu0 %v1082
        %v1121 = vpop.f32.mrf.mxu0
        %v1122 = vadd.f32 0.0, %v1121
        %v1123 = vpop.f32.mrf.mxu0
        %v1124 = vpop.f32.mrf.mxu0
        %v1125 = vpop.f32.mrf.mxu0
        %1126 = vdwg.mxu0
        %v1127 = vsel %vm601, %v1122, -inf
        %1128 = vmax.xlane.f32.xlu0 %v1127
        %v1129 = vpop.xlane.xlu0 %1128
        %v1130 = vsub.f32 %v1122, %v1129
        %v1131 = vmul.f32 %v1130, 1.442695
        %v1132 = vpow.pop %v1131
        %v1133 = vsel %vm601, %v1132, 0.0
        %1134 = vadd.xlane.f32.xlu0 %v1133
        %v1135 = vpop.xlane.xlu0 %1134
        %v1136 = vrcp.pop %v1135
        %v1137 = vmul.f32 %v1132, %v1136
        %v1138 = vpack.c.bf16 %v1137, %v1137
        %1139 = vrot.lane.b32.xlu0 %v600, 104
        %v1140 = vpop.permute.xlu0 %1139
        %v1142 = vsel %vm601, %v1138, 0
        %v1145 = vsel %vm663, %v1140, 0
        %1147 = vmatprep.subr.bf16.mxu0 0
        %1148 = vmatpush1.bf16.msra.mxu0 0
        %1149 = vmatprep.subr.bf16.mxu0 0
        %1150 = vmatpush1.bf16.msra.mxu0 0
        %1151 = vmatprep.subr.bf16.mxu0 0
        %1152 = vmatpush1.bf16.msra.mxu0 0
        %1153 = vmatprep.subr.bf16.mxu0 0
        %1154 = vmatpush1.bf16.msra.mxu0 0
        %1155 = vmatprep.subr.bf16.mxu0 0
        %1156 = vmatpush1.bf16.msra.mxu0 0
        %1157 = vmatprep.subr.bf16.mxu0 0
        %1158 = vmatpush1.bf16.msra.mxu0 0
        %1159 = vmatprep.subr.bf16.mxu0 0
        %1160 = vmatpush1.bf16.msra.mxu0 0
        %1161 = vmatprep.subr.bf16.mxu0 0
        %1162 = vmatpush1.bf16.msra.mxu0 %v1145
        %1163 = vmatprep.subr.bf16.mxu0 0
        %1164 = vmatpush2.bf16.msra.mxu0 0
        %1165 = vmatprep.subr.bf16.mxu0 0
        %1166 = vmatpush2.bf16.msra.mxu0 0
        %1167 = vmatprep.subr.bf16.mxu0 0
        %1168 = vmatpush2.bf16.msra.mxu0 0
        %1169 = vmatprep.subr.bf16.mxu0 0
        %1170 = vmatpush2.bf16.msra.mxu0 0
        %1171 = vmatprep.subr.bf16.mxu0 0
        %1172 = vmatpush2.bf16.msra.mxu0 0
        %1173 = vmatprep.subr.bf16.mxu0 0
        %1174 = vmatpush2.bf16.msra.mxu0 0
        %1175 = vmatprep.subr.bf16.mxu0 0
        %1176 = vmatpush2.bf16.msra.mxu0 0
        %1177 = vmatprep.subr.bf16.mxu0 0
        %1178 = vmatpush2.bf16.msra.mxu0 0
        %1179 = vmatprep.mubr.bf16.mxu0 0
        %1180 = vmatmul.mubr.bf16.gmra.mxu0 %v1142
        %v1181 = vpop.f32.mrf.mxu0
        %v1182 = vadd.f32 0.0, %v1181
        %v1183 = vpop.f32.mrf.mxu0
        %v1184 = vpop.f32.mrf.mxu0
        %v1185 = vpop.f32.mrf.mxu0
        %1186 = vdwg.mxu0
        %v1187 = vpack.c.bf16 %v1182, %v1182
        %s1188 = scalar_lea.vmem %s381, 12
        %v1189 = vld [vmem:[%s1188] sm:$0xf]
        %v1191 = vsel %vm601, %v1187, 0
        %v1194 = vsel %vm663, %v1189, 0
        %1196 = vmatprep.subr.bf16.mxu0 0
        %1197 = vmatpush1.bf16.msra.mxu0 0
        %1198 = vmatprep.subr.bf16.mxu0 0
        %1199 = vmatpush1.bf16.msra.mxu0 0
        %1200 = vmatprep.subr.bf16.mxu0 0
        %1201 = vmatpush1.bf16.msra.mxu0 0
        %1202 = vmatprep.subr.bf16.mxu0 0
        %1203 = vmatpush1.bf16.msra.mxu0 0
        %1204 = vmatprep.subr.bf16.mxu0 0
        %1205 = vmatpush1.bf16.msra.mxu0 0
        %1206 = vmatprep.subr.bf16.mxu0 0
        %1207 = vmatpush1.bf16.msra.mxu0 0
        %1208 = vmatprep.subr.bf16.mxu0 0
        %1209 = vmatpush1.bf16.msra.mxu0 0
        %1210 = vmatprep.subr.bf16.mxu0 0
        %1211 = vmatpush1.bf16.msra.mxu0 %v1194
        %1212 = vmatprep.subr.bf16.mxu0 0
        %1213 = vmatpush2.bf16.msra.mxu0 0
        %1214 = vmatprep.subr.bf16.mxu0 0
        %1215 = vmatpush2.bf16.msra.mxu0 0
        %1216 = vmatprep.subr.bf16.mxu0 0
        %1217 = vmatpush2.bf16.msra.mxu0 0
        %1218 = vmatprep.subr.bf16.mxu0 0
        %1219 = vmatpush2.bf16.msra.mxu0 0
        %1220 = vmatprep.subr.bf16.mxu0 0
        %1221 = vmatpush2.bf16.msra.mxu0 0
        %1222 = vmatprep.subr.bf16.mxu0 0
        %1223 = vmatpush2.bf16.msra.mxu0 0
        %1224 = vmatprep.subr.bf16.mxu0 0
        %1225 = vmatpush2.bf16.msra.mxu0 0
        %1226 = vmatprep.subr.bf16.mxu0 0
        %1227 = vmatpush2.bf16.msra.mxu0 0
        %1228 = vmatprep.mubr.bf16.mxu0 0
        %1229 = vmatmul.mubr.bf16.gmra.mxu0 %v1191
        %v1230 = vpop.f32.mrf.mxu0
        %v1231 = vadd.f32 0.0, %v1230
        %v1232 = vpop.f32.mrf.mxu0
        %v1233 = vpop.f32.mrf.mxu0
        %v1234 = vpop.f32.mrf.mxu0
        %1235 = vdwg.mxu0
        %v1236 = vadd.f32 %v1076, %v1231
        %v1237 = vlaneseq
        %v1238 = vshrl.u32 %v1237, 7
        %v1239 = vsub.s32 3, %v1238
        %v1240 = vrot.slane %v410, %v1239
        %v1241 = vadd.f32 %v1236, %v1240
        %v1242 = vadd.f32 %v408, %v1241
        %v1243 = vsel %vm432, %v1242, 0.0
        %1244 = vadd.xlane.f32.xlu0 %v1243
        %v1245 = vpop.xlane.xlu0 %1244
        %v1246 = vrcp.pop 32.0
        %v1247 = vmul.f32 %v1245, %v1246
        %v1248 = vsub.f32 %v1242, %v1247
        %v1249 = vmul.f32 %v1248, %v1248
        %v1250 = vsel %vm432, %v1249, 0.0
        %1251 = vadd.xlane.f32.xlu0 %v1250
        %v1252 = vpop.xlane.xlu0 %1251
        %v1253 = vmul.f32 %v1252, %v1246
        %v1254 = vadd.f32 %v1253, 1e-05
        %v1255 = vrsqrt.pop %v1254
        %v1256 = vmul.f32 %v1248, %v1255
        %v1257 = vlaneseq
        %v1258 = vshrl.u32 %v1257, 7
        %v1259 = vsub.s32 5, %v1258
        %v1260 = vrot.slane %v410, %v1259
        %v1261 = vmul.f32 %v1256, %v1260
        %v1262 = vlaneseq
        %v1263 = vshrl.u32 %v1262, 7
        %v1264 = vsub.s32 6, %v1263
        %v1265 = vrot.slane %v410, %v1264
        %v1266 = vadd.f32 %v1261, %v1265
        %v1267 = vpack.c.bf16 %v1266, %v1266
        %v1268 = vld [vmem:[%s386] sm:$0xf]
        %v1269 = vld [vmem:[%s386 + $0x4] sm:$0xf]
        %v1270 = vld [vmem:[%s386 + $0x8] sm:$0xf]
        %v1271 = vld [vmem:[%s386 + $0xc] sm:$0xf]
        %v1272 = vld [vmem:[%s389] sm:$0x1]
        %v1274 = vlaneseq
        %v1275 = vshrl.u32 %v1274, 7
        %v1276 = vsub.s32 0, %v1275
        %v1277 = vrot.slane %v1272, %v1276
        %v1283 = vunpack.c.l.b16 %v1268
        %v1284 = vunpack.c.l.b16 %v1269
        %v1285 = vunpack.c.l.b16 %v1270
        %v1286 = vunpack.c.l.b16 %v1271
        %v1287 = vpack.c.b16 %v1284, %v1283
        %v1288 = vpack.c.b16 %v1286, %v1285
        %v1292 = vsel %vm432, %v1267, 0
        %1294 = vmatprep.subr.bf16.mxu0 0
        %1295 = vmatpush1.bf16.msra.mxu0 0
        %1296 = vmatprep.subr.bf16.mxu0 0
        %1297 = vmatpush1.bf16.msra.mxu0 0
        %1298 = vmatprep.subr.bf16.mxu0 0
        %1299 = vmatpush1.bf16.msra.mxu0 0
        %1300 = vmatprep.subr.bf16.mxu0 0
        %1301 = vmatpush1.bf16.msra.mxu0 0
        %1302 = vmatprep.subr.bf16.mxu0 0
        %1303 = vmatpush1.bf16.msra.mxu0 0
        %1304 = vmatprep.subr.bf16.mxu0 0
        %1305 = vmatpush1.bf16.msra.mxu0 0
        %1306 = vmatprep.subr.bf16.mxu0 0
        %1307 = vmatpush1.bf16.msra.mxu0 %v1288
        %1308 = vmatprep.subr.bf16.mxu0 0
        %1309 = vmatpush1.bf16.msra.mxu0 %v1287
        %1310 = vmatprep.subr.bf16.mxu0 0
        %1311 = vmatpush2.bf16.msra.mxu0 0
        %1312 = vmatprep.subr.bf16.mxu0 0
        %1313 = vmatpush2.bf16.msra.mxu0 0
        %1314 = vmatprep.subr.bf16.mxu0 0
        %1315 = vmatpush2.bf16.msra.mxu0 0
        %1316 = vmatprep.subr.bf16.mxu0 0
        %1317 = vmatpush2.bf16.msra.mxu0 0
        %1318 = vmatprep.subr.bf16.mxu0 0
        %1319 = vmatpush2.bf16.msra.mxu0 0
        %1320 = vmatprep.subr.bf16.mxu0 0
        %1321 = vmatpush2.bf16.msra.mxu0 0
        %1322 = vmatprep.subr.bf16.mxu0 0
        %1323 = vmatpush2.bf16.msra.mxu0 0
        %1324 = vmatprep.subr.bf16.mxu0 0
        %1325 = vmatpush2.bf16.msra.mxu0 0
        %1326 = vmatprep.mubr.bf16.mxu0 0
        %1327 = vmatmul.mubr.bf16.gmra.mxu0 %v1292
        %v1328 = vpop.f32.mrf.mxu0
        %v1329 = vadd.f32 %v1277, %v1328
        %v1330 = vpop.f32.mrf.mxu0
        %v1331 = vpop.f32.mrf.mxu0
        %v1332 = vpop.f32.mrf.mxu0
        %1333 = vdwg.mxu0
        %v1334 = vmax.f32 %v1329, 0.0
        %v1335 = vpack.c.bf16 %v1334, %v1334
        %v1336 = vld [vmem:[%s394] sm:$0xf]
        %v1337 = vld [vmem:[%s394 + $0x4] sm:$0xf]
        %v1338 = vld [vmem:[%s394 + $0x8] sm:$0xf]
        %v1339 = vld [vmem:[%s394 + $0xc] sm:$0xf]
        %v1340 = vld [vmem:[%s394 + $0x10] sm:$0xf]
        %v1341 = vld [vmem:[%s394 + $0x14] sm:$0xf]
        %v1342 = vld [vmem:[%s394 + $0x18] sm:$0xf]
        %v1343 = vld [vmem:[%s394 + $0x1c] sm:$0xf]
        %v1344 = vld [vmem:[%s394 + $0x20] sm:$0xf]
        %v1345 = vld [vmem:[%s394 + $0x24] sm:$0xf]
        %v1346 = vld [vmem:[%s394 + $0x28] sm:$0xf]
        %v1347 = vld [vmem:[%s394 + $0x2c] sm:$0xf]
        %v1348 = vld [vmem:[%s394 + $0x30] sm:$0xf]
        %v1349 = vld [vmem:[%s394 + $0x34] sm:$0xf]
        %v1350 = vld [vmem:[%s394 + $0x38] sm:$0xf]
        %v1351 = vld [vmem:[%s394 + $0x3c] sm:$0xf]
        %v1352 = vlaneseq
        %v1353 = vshrl.u32 %v1352, 7
        %v1354 = vsub.s32 4, %v1353
        %v1355 = vrot.slane %v410, %v1354
        %v1372 = vunpack.c.l.b16 %v1336
        %v1373 = vunpack.c.l.b16 %v1337
        %v1374 = vunpack.c.l.b16 %v1338
        %v1375 = vunpack.c.l.b16 %v1339
        %v1376 = vunpack.c.l.b16 %v1340
        %v1377 = vunpack.c.l.b16 %v1341
        %v1378 = vunpack.c.l.b16 %v1342
        %v1379 = vunpack.c.l.b16 %v1343
        %v1380 = vunpack.c.l.b16 %v1344
        %v1381 = vunpack.c.l.b16 %v1345
        %v1382 = vunpack.c.l.b16 %v1346
        %v1383 = vunpack.c.l.b16 %v1347
        %v1384 = vunpack.c.l.b16 %v1348
        %v1385 = vunpack.c.l.b16 %v1349
        %v1386 = vunpack.c.l.b16 %v1350
        %v1387 = vunpack.c.l.b16 %v1351
        %v1388 = vpack.c.b16 %v1373, %v1372
        %v1389 = vpack.c.b16 %v1375, %v1374
        %v1390 = vpack.c.b16 %v1377, %v1376
        %v1391 = vpack.c.b16 %v1379, %v1378
        %v1392 = vpack.c.b16 %v1381, %v1380
        %v1393 = vpack.c.b16 %v1383, %v1382
        %v1394 = vpack.c.b16 %v1385, %v1384
        %v1395 = vpack.c.b16 %v1387, %v1386
        %1404 = vmatprep.subr.bf16.mxu0 0
        %1405 = vmatpush1.bf16.msra.mxu0 %v1395
        %1406 = vmatprep.subr.bf16.mxu0 0
        %1407 = vmatpush1.bf16.msra.mxu0 %v1394
        %1408 = vmatprep.subr.bf16.mxu0 0
        %1409 = vmatpush1.bf16.msra.mxu0 %v1393
        %1410 = vmatprep.subr.bf16.mxu0 0
        %1411 = vmatpush1.bf16.msra.mxu0 %v1392
        %1412 = vmatprep.subr.bf16.mxu0 0
        %1413 = vmatpush1.bf16.msra.mxu0 %v1391
        %1414 = vmatprep.subr.bf16.mxu0 0
        %1415 = vmatpush1.bf16.msra.mxu0 %v1390
        %1416 = vmatprep.subr.bf16.mxu0 0
        %1417 = vmatpush1.bf16.msra.mxu0 %v1389
        %1418 = vmatprep.subr.bf16.mxu0 0
        %1419 = vmatpush1.bf16.msra.mxu0 %v1388
        %1420 = vmatprep.subr.bf16.mxu0 0
        %1421 = vmatpush2.bf16.msra.mxu0 0
        %1422 = vmatprep.subr.bf16.mxu0 0
        %1423 = vmatpush2.bf16.msra.mxu0 0
        %1424 = vmatprep.subr.bf16.mxu0 0
        %1425 = vmatpush2.bf16.msra.mxu0 0
        %1426 = vmatprep.subr.bf16.mxu0 0
        %1427 = vmatpush2.bf16.msra.mxu0 0
        %1428 = vmatprep.subr.bf16.mxu0 0
        %1429 = vmatpush2.bf16.msra.mxu0 0
        %1430 = vmatprep.subr.bf16.mxu0 0
        %1431 = vmatpush2.bf16.msra.mxu0 0
        %1432 = vmatprep.subr.bf16.mxu0 0
        %1433 = vmatpush2.bf16.msra.mxu0 0
        %1434 = vmatprep.subr.bf16.mxu0 0
        %1435 = vmatpush2.bf16.msra.mxu0 0
        %1436 = vmatprep.mubr.bf16.mxu0 0
        %1437 = vmatmul.mubr.bf16.gmra.mxu0 %v1335
        %v1438 = vpop.f32.mrf.mxu0
        %v1439 = vadd.f32 %v1355, %v1438
        %v1440 = vpop.f32.mrf.mxu0
        %v1441 = vpop.f32.mrf.mxu0
        %v1442 = vpop.f32.mrf.mxu0
        %1443 = vdwg.mxu0
        %v1444 = vadd.f32 %v1266, %v1439
        %v1445 = vsel %vm432, %v1444, 0.0
        %1446 = vadd.xlane.f32.xlu0 %v1445
        %v1447 = vpop.xlane.xlu0 %1446
        %v1448 = vmul.f32 %v1447, %v1246
        %v1449 = vsub.f32 %v1444, %v1448
        %v1450 = vmul.f32 %v1449, %v1449
        %v1451 = vsel %vm432, %v1450, 0.0
        %1452 = vadd.xlane.f32.xlu0 %v1451
        %v1453 = vpop.xlane.xlu0 %1452
        %v1454 = vmul.f32 %v1453, %v1246
        %v1455 = vadd.f32 %v1454, 1e-05
        %v1456 = vrsqrt.pop %v1455
        %v1457 = vmul.f32 %v1449, %v1456
        %v1458 = vlaneseq
        %v1459 = vshrl.u32 %v1458, 7
        %v1460 = vsub.s32 7, %v1459
        %v1461 = vrot.slane %v410, %v1460
        %v1462 = vmul.f32 %v1457, %v1461
        %v1463 = vlaneseq
        %v1464 = vshrl.u32 %v1463, 7
        %v1465 = vsub.s32 0, %v1464
        %v1466 = vrot.slane %v411, %v1465
        %v1467 = vadd.f32 %v1462, %v1466
        %1468 = vst.msk [vmem:[#allocation2] sm:$0xff] %vm432, %v1467
        %p1469 = scmp.eq.s32.totalorder %s26, 1
        // Predicated region
        $region53: #{tpu_custom_call.1} parent=47 // pred_check
          %p1470 = pneg %p1469
        $region54: #{tpu_custom_call.1} parent=47 // pred_check_branch
          %1472 = sbr.rel (%p1470) target = $region56
        $region55: #{tpu_custom_call.1} parent=47 // pred_region
          %1473 = vst.msk [vmem:[%s367] sm:$0xff] %vm432, %v1467
        $region56: #{tpu_custom_call.1} parent=47 // pred_fallthru
          _
        %s1474 = sand.u32 %s223, 1
        %s1475 = scalar_lea.sflag [#allocation4], %s1474
        %s1476 = sand.u32 %s223, 1
        %s1477 = smul.addr %s1476, 8
        %s1478 = scalar_lea.vmem [#allocation3], %s1477
        // Predicated region
        $region57: #{tpu_custom_call.1} parent=47 // pred_check
          %p1479 = pneg %p233
        $region58: #{tpu_custom_call.1} parent=47 // pred_check_branch
          %1481 = sbr.rel (%p1479) target = $region60
        $region59: #{tpu_custom_call.1} parent=47 // pred_region
          %s1483 = ssub.s32 128, 128
          %1484 = vsyncadd %s1475, %s1483
          %s1485 = smul.addr %s25, 128
          %s1486 = scalar_lea.hbm %s7, %s1485
          %s1488 = sshll.u32 %s1478, 4
          %s1489 = int_to_ptr.vmem [resolvable:$true] %s1488
          %1491 = dma.vmem_to_hbm [thread:$0]  %s1489, 128, %s1486, %s1475
        $region60: #{tpu_custom_call.1} parent=47 // pred_fallthru
          _
      $region48: #{tpu_custom_call.1} parent=5 // pred_fallthru
        _
      %p1492 = scmp.le.s32.totalorder 2, %s16
      // Predicated region
      $region61: #{tpu_custom_call.1} parent=5 // pred_check
        %p1493 = pneg %p1492
      $region62: #{tpu_custom_call.1} parent=5 // pred_check_branch
        %1495 = sbr.rel (%p1493) target = $region64
      $region63: #{tpu_custom_call.1} parent=5 // pred_region
        %s1496 = ssub.s32 %s16, 2
        // Predicated region
        $region65: #{tpu_custom_call.1} parent=63 // pred_check
          %p1497 = pneg %p239
        $region66: #{tpu_custom_call.1} parent=63 // pred_check_branch
          %1499 = sbr.rel (%p1497) target = $region68
        $region67: #{tpu_custom_call.1} parent=63 // pred_region
          %s1500 = sand.u32 %s224, 1
          %s1501 = scalar_lea.sflag [#allocation4], %s1500
          %s1502 = sand.u32 %s224, 1
          %s1503 = smul.addr %s1502, 8
          %s1504 = scalar_lea.vmem [#allocation3], %s1503
          %1505 = dma.done %s1501, 128
        $region68: #{tpu_custom_call.1} parent=63 // pred_fallthru
          _
      $region64: #{tpu_custom_call.1} parent=5 // pred_fallthru
        _
    $region6: #{tpu_custom_call.1} parent=1 // loop_footer
      %s20 = sadd.s32 1, %s16
    $region7: #{tpu_custom_call.1} parent=1 // loop_footer_branch
      %15 = sbr.rel target = $region3
    $region8: #{tpu_custom_call.1} parent=1 // loop_exit
      _
    %1506 = vsyncpa [#allocation4], 1
    %s1507 = scalar_lea.sflag [#allocation4], 1
    %1508 = vsyncpa %s1507, 1

</llo_original>
